<compile_context>
chip_gen: v7x
topology: tpu7x:2x2x1
jax: 0.10.0
libtpu: 0.0.40
codegen_flags: <defaults>
</compile_context>

<pallas_src>
import functools

import jax
import jax.numpy as jnp
from jax import lax
from jax.experimental import pallas as pl
from jax.experimental.pallas import tpu as pltpu


def _round_up(a: int, b: int) -> int:
    return (a + b - 1) // b * b


def _graphormer_head_kernel(
    mask_ref, effk_ref,                 # scalar-prefetch (SMEM, int32, 1-D)
    q_ref, k_ref, v_ref, adj_ref,       # VMEM inputs
    out_ref,                            # VMEM output
    m_scr, l_scr, acc_scr,              # VMEM scratch
    *, exp_dtype,
):
    qi = pl.program_id(0)
    ki = pl.program_id(1)
    nk = pl.num_programs(1)

    # ---- per-query-block init (first key step) ------------------------------
    @pl.when(ki == 0)
    def _init():
        m_scr[...] = jnp.full(m_scr.shape, -jnp.inf, m_scr.dtype)
        l_scr[...] = jnp.zeros(l_scr.shape, l_scr.dtype)
        acc_scr[...] = jnp.zeros(acc_scr.shape, acc_scr.dtype)

    # ---- block-sparse online-softmax update ----------------------------------
    @pl.when(mask_ref[qi * nk + ki] != 0)
    def _compute():
        # scores: q @ k^T, bf16 operands, f32 accumulation, no transpose.
        s = lax.dot_general(
            q_ref[...], k_ref[...],
            dimension_numbers=(((1,), (1,)), ((), ())),
            preferred_element_type=jnp.float32)                  # (tq, tk)

        # Reference semantics: non-edges (and padded columns) get -1e6.  For
        # any row with >= 1 real edge, exp(-1e6 - m) underflows to exactly 0,
        # so those columns contribute nothing; rows with zero edges are fixed
        # up on the host (uniform softmax == mean(V)).
        s = jnp.where(adj_ref[...] != 0, s, jnp.float32(-1e6))

        m_prev = m_scr[...]
        m_new = jnp.maximum(m_prev, jnp.max(s, axis=-1, keepdims=True))
        alpha = jnp.exp(m_prev - m_new)
        # exp in bf16 (v6e/v7x EUP) or f32 (v5e) depending on exp_dtype.
        p = jnp.exp((s - m_new).astype(exp_dtype))
        l_scr[...] = alpha * l_scr[...] + jnp.sum(
            p.astype(jnp.float32), axis=-1, keepdims=True)
        acc_scr[...] = alpha * acc_scr[...] + jnp.dot(
            p.astype(v_ref.dtype), v_ref[...],
            preferred_element_type=jnp.float32)
        m_scr[...] = m_new

    # ---- finalize on the last key step ---------------------------------------
    @pl.when(ki == nk - 1)
    def _finalize():
        l = l_scr[...]
        safe_l = jnp.where(l > 0.0, l, jnp.float32(1.0))   # all-skipped rows
        out_ref[...] = (acc_scr[...] *
                        pl.reciprocal(safe_l, approx=True)).astype(out_ref.dtype)


def graphormer_attention_head(x, edge_index, wq, bq, wk, bk, wv, bv,
                              *, block_q=256, block_k=256,
                              compute_dtype=jnp.bfloat16,
                              exp_dtype=jnp.bfloat16):
    """Forward pass of GraphormerAttentionHead (ptr=None path).

    x:          (N, dim_in) float
    edge_index: (2, E) int
    wq/wk/wv:   (dim_out, dim_in) torch nn.Linear weights; bq/bk/bv: (dim_out,)

    Defaults target v6e/v7x (256x256 tiles, bf16 exp).  For v5e use
    block_q=128, block_k<=256, exp_dtype=jnp.float32.
    """
    N, dim_in = x.shape
    dim_q, dim_k = wq.shape[0], wk.shape[0]
    if dim_q != dim_k:
        raise ValueError(
            f"q @ k^T requires dim_q == dim_k (got {dim_q} vs {dim_k})")
    assert wv.shape[0] == dim_k

    tq, tk = block_q, block_k
    assert max(tq, tk) % min(tq, tk) == 0
    n_pad = _round_up(max(N, 1), max(tq, tk))
    d_pad = _round_up(dim_k, 128)       # lane-dense matmuls / unmasked stores
    nq, nk = n_pad // tq, n_pad // tk

    # ---- host-side Q/K/V projections (bf16 operands, f32 accumulation) -------
    scale = 1.0 / float(dim_q) ** 0.5
    x_bf = x.astype(jnp.bfloat16)
    wq_s = (wq.T * scale).astype(jnp.bfloat16)          # fold 1/sqrt(dim_q)
    wk_t = wk.T.astype(jnp.bfloat16)
    wv_t = wv.T.astype(jnp.bfloat16)
    q_f = jnp.dot(x_bf, wq_s, preferred_element_type=jnp.float32) \
        + (bq * scale).astype(jnp.float32)
    k_f = jnp.dot(x_bf, wk_t, preferred_element_type=jnp.float32) \
        + bk.astype(jnp.float32)
    v_f = jnp.dot(x_bf, wv_t, preferred_element_type=jnp.float32) \
        + bv.astype(jnp.float32)
    v_mean = jnp.mean(v_f, axis=0)                      # zero-neighbour fallback

    def _pad(a, d):
        return jnp.pad(a, ((0, n_pad - N), (0, d_pad - d))).astype(compute_dtype)

    q_pad, k_pad, v_pad = _pad(q_f, dim_q), _pad(k_f, dim_k), _pad(v_f, dim_k)

    # ---- adjacency (dense int8) + block-sparsity metadata --------------------
    src, dst = edge_index[0], edge_index[1]
    adj = jnp.zeros((N, N), jnp.int8).at[src, dst].set(jnp.int8(1))
    adj_pad = jnp.pad(adj, ((0, n_pad - N), (0, n_pad - N)))

    block_mask2d = jnp.zeros((nq, nk), jnp.int32).at[src // tq, dst // tk].set(1)
    has = block_mask2d > 0
    kcol = jnp.broadcast_to(jnp.arange(nk, dtype=jnp.int32)[None, :], (nq, nk))
    fwd = lax.cummax(jnp.where(has, kcol, -1), axis=1)               # <= ki
    bwd = lax.cummin(jnp.where(has, kcol, nk), axis=1, reverse=True)  # >= ki
    effk2d = jnp.where(fwd >= 0, fwd,
                       jnp.where(bwd < nk, bwd, 0)).astype(jnp.int32)
    block_mask = block_mask2d.reshape(-1)
    effk = effk2d.reshape(-1)

    deg = jnp.zeros((N,), jnp.int32).at[src].add(1)
    isolated = deg == 0

    kernel = functools.partial(_graphormer_head_kernel, exp_dtype=exp_dtype)

    out_pad = pl.pallas_call(
        kernel,
        out_shape=jax.ShapeDtypeStruct((n_pad, d_pad), jnp.float32),
        grid_spec=pltpu.PrefetchScalarGridSpec(
            num_scalar_prefetch=2,
            grid=(nq, nk),
            in_specs=[
                # q: fetched once per query block (constant across ki).
                pl.BlockSpec((tq, d_pad), lambda qi, ki, m, e: (qi, 0)),
                # k / v / adj: skipped steps re-point at the previous needed
                # key block, so their DMAs are elided by the pipeline.
                pl.BlockSpec((tk, d_pad),
                             lambda qi, ki, m, e: (e[qi * nk + ki], 0)),
                pl.BlockSpec((tk, d_pad),
                             lambda qi, ki, m, e: (e[qi * nk + ki], 0)),
                pl.BlockSpec((tq, tk),
                             lambda qi, ki, m, e: (qi, e[qi * nk + ki])),
            ],
            out_specs=pl.BlockSpec((tq, d_pad), lambda qi, ki, m, e: (qi, 0)),
            scratch_shapes=[
                pltpu.VMEM((tq, 1), jnp.float32),      # running max m
                pltpu.VMEM((tq, 1), jnp.float32),      # running denom l
                pltpu.VMEM((tq, d_pad), jnp.float32),  # output accumulator
            ],
        ),
        compiler_params=pltpu.CompilerParams(
            dimension_semantics=("parallel", "arbitrary"),
        ),
    )(block_mask, effk, q_pad, k_pad, v_pad, adj_pad)

    out = out_pad[:N, :dim_k]
    # Rows with zero neighbours: reference gives a uniform softmax over all
    # nodes, i.e. the column-mean of V.
    return jnp.where(isolated[:, None], v_mean[None, :], out)


def _reference(x, edge_index, wq, bq, wk, bk, wv, bv):
    """Pure-JAX f32 reference mirroring the PyTorch forward (ptr=None)."""
    q = x @ wq.T + bq
    k = x @ wk.T + bk
    v = x @ wv.T + bv
    N = x.shape[0]
    adj = jnp.zeros((N, N), jnp.float32).at[
        edge_index[0], edge_index[1]].set(1.0)
    a = (q @ k.T) / (q.shape[-1] ** 0.5)
    a = a * adj + (1.0 - adj) * (-1000000.0)
    sm = jax.nn.softmax(a, axis=-1)
    return sm @ v


if __name__ == "__main__":
    N, dim_in, dim_q, dim_k = 200, 32, 16, 16   # dim_q == dim_k for q @ k^T
    E = 400

    key = jax.random.PRNGKey(0)
    kx, ks, kd, kwq, kbq, kwk, kbk, kwv, kbv = jax.random.split(key, 9)

    x = jax.random.normal(kx, (N, dim_in), dtype=jnp.float32)
    # Sources only among the first 180 nodes (so nodes 180..199 have zero
    # neighbours -> exercises the uniform-softmax fallback) and destinations
    # only among the first 128 nodes (so with 128-wide key tiles the ki=1
    # blocks are all-non-edge -> exercises the block-sparse skip path).
    src = jax.random.randint(ks, (E,), 0, 180)
    dst = jax.random.randint(kd, (E,), 0, 128)
    edge_index = jnp.stack([src, dst]).astype(jnp.int32)

    # nn.Linear-shaped parameters: weight (out, in), bias (out,)
    wq = jax.random.normal(kwq, (dim_q, dim_in), dtype=jnp.float32) * 0.1
    bq = jax.random.normal(kbq, (dim_q,), dtype=jnp.float32) * 0.1
    wk = jax.random.normal(kwk, (dim_k, dim_in), dtype=jnp.float32) * 0.1
    bk = jax.random.normal(kbk, (dim_k,), dtype=jnp.float32) * 0.1
    wv = jax.random.normal(kwv, (dim_k, dim_in), dtype=jnp.float32) * 0.1
    bv = jax.random.normal(kbv, (dim_k,), dtype=jnp.float32) * 0.1

    ref = _reference(x, edge_index, wq, bq, wk, bk, wv, bv)

    # Default config (v6e/v7x: 256x256 tiles, bf16 exp) -> single-tile grid here.
    out_a = graphormer_attention_head(x, edge_index, wq, bq, wk, bk, wv, bv)
    out_a = jax.block_until_ready(out_a)
    assert out_a.shape == (N, dim_k)
    err_a = float(jnp.max(jnp.abs(out_a - ref)))
    assert jnp.allclose(out_a, ref, atol=3e-2, rtol=3e-2), \
        f"mismatch vs reference (default tiles, max abs err {err_a})"

    # v5e-style config (128x128 tiles, f32 exp) -> 2x2 grid, exercises the
    # online-softmax carry, block skipping and DMA re-pointing.
    out_b = graphormer_attention_head(
        x, edge_index, wq, bq, wk, bk, wv, bv,
        block_q=128, block_k=128, exp_dtype=jnp.float32)
    out_b = jax.block_until_ready(out_b)
    err_b = float(jnp.max(jnp.abs(out_b - ref)))
    assert jnp.allclose(out_b, ref, atol=3e-2, rtol=3e-2), \
        f"mismatch vs reference (128 tiles, max abs err {err_b})"

    print("KERNEL_OK")
</pallas_src>

<mosaic_0001>
module attributes {stable_mosaic.version = 11 : i64} {
  func.func @_graphormer_head_kernel(%arg0: i32, %arg1: i32, %arg2: memref<1xi32, #tpu.memory_space<smem>>, %arg3: memref<1xi32, #tpu.memory_space<smem>>, %arg4: memref<256x128xbf16, #tpu.memory_space<vmem>>, %arg5: memref<256x128xbf16, #tpu.memory_space<vmem>>, %arg6: memref<256x128xbf16, #tpu.memory_space<vmem>>, %arg7: memref<256x256xi8, #tpu.memory_space<vmem>>, %arg8: memref<256x128xf32, #tpu.memory_space<vmem>>, %arg9: memref<256x1xf32, #tpu.memory_space<vmem>>, %arg10: memref<256x1xf32, #tpu.memory_space<vmem>>, %arg11: memref<256x128xf32, #tpu.memory_space<vmem>>) attributes {dimension_semantics = [#tpu.dimension_semantics<parallel>, #tpu.dimension_semantics<arbitrary>], iteration_bounds = array<i64: 1, 1>, scalar_prefetch = 2 : i64, scratch_operands = 3 : i64, tpu.core_type = #tpu.core_type<tc>, window_params = [{transform_indices = @transform_0, window_bounds = array<i64: 256, 128>}, {transform_indices = @transform_1, window_bounds = array<i64: 256, 128>}, {transform_indices = @transform_2, window_bounds = array<i64: 256, 128>}, {transform_indices = @transform_3, window_bounds = array<i64: 256, 256>}, {transform_indices = @transform_4, window_bounds = array<i64: 256, 128>}]} {
    %c0_i32 = arith.constant 0 : i32
    %0 = arith.cmpi eq, %arg1, %c0_i32 : i32
    %1 = arith.extui %0 : i1 to i32
    %c0_i32_0 = arith.constant 0 : i32
    %2 = arith.cmpi ne, %1, %c0_i32_0 : i32
    scf.if %2 {
      %cst = arith.constant 0xFF800000 : f32
      %13 = vector.broadcast %cst : f32 to vector<256x1xf32>
      %c0 = arith.constant 0 : index
      %c0_5 = arith.constant 0 : index
      %14 = vector.load %arg9[%c0, %c0_5] : memref<256x1xf32, #tpu.memory_space<vmem>>, vector<256x1xf32>
      tpu.vector_store %arg9[%c0, %c0_5], %13 {strides = array<i32>} : memref<256x1xf32, #tpu.memory_space<vmem>>, vector<256x1xf32>,
      %cst_6 = arith.constant 0.000000e+00 : f32
      %15 = vector.broadcast %cst_6 : f32 to vector<256x1xf32>
      %c0_7 = arith.constant 0 : index
      %c0_8 = arith.constant 0 : index
      %16 = vector.load %arg10[%c0_7, %c0_8] : memref<256x1xf32, #tpu.memory_space<vmem>>, vector<256x1xf32>
      tpu.vector_store %arg10[%c0_7, %c0_8], %15 {strides = array<i32>} : memref<256x1xf32, #tpu.memory_space<vmem>>, vector<256x1xf32>,
      %cst_9 = arith.constant 0.000000e+00 : f32
      %17 = vector.broadcast %cst_9 : f32 to vector<256x128xf32>
      %c0_10 = arith.constant 0 : index
      %c0_11 = arith.constant 0 : index
      %18 = vector.load %arg11[%c0_10, %c0_11] : memref<256x128xf32, #tpu.memory_space<vmem>>, vector<256x128xf32>
      tpu.vector_store %arg11[%c0_10, %c0_11], %17 {strides = array<i32>} : memref<256x128xf32, #tpu.memory_space<vmem>>, vector<256x128xf32>,
    } else {
    }
    %c1_i32 = arith.constant 1 : i32
    %3 = arith.muli %arg0, %c1_i32 : i32
    %4 = arith.addi %3, %arg1 : i32
    %5 = arith.index_cast %4 : i32 to index
    %6 = memref.load %arg2[%5] : memref<1xi32, #tpu.memory_space<smem>>
    %c0_i32_1 = arith.constant 0 : i32
    %7 = arith.cmpi ne, %6, %c0_i32_1 : i32
    %8 = arith.extui %7 : i1 to i32
    %c0_i32_2 = arith.constant 0 : i32
    %9 = arith.cmpi ne, %8, %c0_i32_2 : i32
    scf.if %9 {
      %c0 = arith.constant 0 : index
      %c0_5 = arith.constant 0 : index
      %13 = vector.load %arg4[%c0, %c0_5] : memref<256x128xbf16, #tpu.memory_space<vmem>>, vector<256x128xbf16>
      %c0_6 = arith.constant 0 : index
      %c0_7 = arith.constant 0 : index
      %14 = vector.load %arg5[%c0_6, %c0_7] : memref<256x128xbf16, #tpu.memory_space<vmem>>, vector<256x128xbf16>
      %cst = arith.constant dense<0.000000e+00> : vector<256x256xf32>
      %15 = tpu.matmul %13, %14, %cst {dimension_numbers = #tpu.dot_dimension_numbers<[1], [1], [0], [0], [0, 0, 1, 0], [], []>} : vector<256x128xbf16>, vector<256x128xbf16>, vector<256x256xf32> -> vector<256x256xf32>
      %c0_8 = arith.constant 0 : index
      %c0_9 = arith.constant 0 : index
      %16 = vector.load %arg7[%c0_8, %c0_9] : memref<256x256xi8, #tpu.memory_space<vmem>>, vector<256x256xi8>
      %c0_i8 = arith.constant 0 : i8
      %17 = vector.broadcast %c0_i8 : i8 to vector<256x256xi8>
      %18 = arith.cmpi ne, %16, %17 : vector<256x256xi8>
      %cst_10 = arith.constant -1.000000e+06 : f32
      %19 = vector.broadcast %cst_10 : f32 to vector<256x256xf32>
      %20 = arith.select %18, %15, %19 : vector<256x256xi1>, vector<256x256xf32>
      %c0_11 = arith.constant 0 : index
      %c0_12 = arith.constant 0 : index
      %21 = vector.load %arg9[%c0_11, %c0_12] : memref<256x1xf32, #tpu.memory_space<vmem>>, vector<256x1xf32>
      %cst_13 = arith.constant dense<0xFF800000> : vector<256xf32>
      %22 = vector.multi_reduction <maximumf>, %20, %cst_13 [1] : vector<256x256xf32> to vector<256xf32>
      %23 = vector.shape_cast %22 : vector<256xf32> to vector<256x1xf32>
      %24 = arith.maximumf %21, %23 : vector<256x1xf32>
      %25 = arith.subf %21, %24 : vector<256x1xf32>
      %26 = math.exp %25 : vector<256x1xf32>
      %27 = vector.broadcast %24 : vector<256x1xf32> to vector<256x256xf32>
      %28 = arith.subf %20, %27 : vector<256x256xf32>
      %29 = arith.truncf %28 : vector<256x256xf32> to vector<256x256xbf16>
      %30 = math.exp %29 : vector<256x256xbf16>
      %c0_14 = arith.constant 0 : index
      %c0_15 = arith.constant 0 : index
      %31 = vector.load %arg10[%c0_14, %c0_15] : memref<256x1xf32, #tpu.memory_space<vmem>>, vector<256x1xf32>
      %32 = arith.mulf %26, %31 : vector<256x1xf32>
      %33 = arith.extf %30 : vector<256x256xbf16> to vector<256x256xf32>
      %cst_16 = arith.constant dense<0.000000e+00> : vector<256xf32>
      %34 = vector.multi_reduction <add>, %33, %cst_16 [1] : vector<256x256xf32> to vector<256xf32>
      %35 = vector.shape_cast %34 : vector<256xf32> to vector<256x1xf32>
      %36 = arith.addf %32, %35 : vector<256x1xf32>
      %c0_17 = arith.constant 0 : index
      %c0_18 = arith.constant 0 : index
      %37 = vector.load %arg10[%c0_17, %c0_18] : memref<256x1xf32, #tpu.memory_space<vmem>>, vector<256x1xf32>
      tpu.vector_store %arg10[%c0_17, %c0_18], %36 {strides = array<i32>} : memref<256x1xf32, #tpu.memory_space<vmem>>, vector<256x1xf32>,
      %c0_19 = arith.constant 0 : index
      %c0_20 = arith.constant 0 : index
      %38 = vector.load %arg11[%c0_19, %c0_20] : memref<256x128xf32, #tpu.memory_space<vmem>>, vector<256x128xf32>
      %39 = vector.broadcast %26 : vector<256x1xf32> to vector<256x128xf32>
      %40 = arith.mulf %39, %38 : vector<256x128xf32>
      %c0_21 = arith.constant 0 : index
      %c0_22 = arith.constant 0 : index
      %41 = vector.load %arg6[%c0_21, %c0_22] : memref<256x128xbf16, #tpu.memory_space<vmem>>, vector<256x128xbf16>
      %cst_23 = arith.constant dense<0.000000e+00> : vector<256x128xf32>
      %42 = tpu.matmul %30, %41, %cst_23 {dimension_numbers = #tpu.dot_dimension_numbers<[1], [0], [0], [1], [0, 0, 1, 1], [], []>} : vector<256x256xbf16>, vector<256x128xbf16>, vector<256x128xf32> -> vector<256x128xf32>
      %43 = arith.addf %40, %42 : vector<256x128xf32>
      %c0_24 = arith.constant 0 : index
      %c0_25 = arith.constant 0 : index
      %44 = vector.load %arg11[%c0_24, %c0_25] : memref<256x128xf32, #tpu.memory_space<vmem>>, vector<256x128xf32>
      tpu.vector_store %arg11[%c0_24, %c0_25], %43 {strides = array<i32>} : memref<256x128xf32, #tpu.memory_space<vmem>>, vector<256x128xf32>,
      %c0_26 = arith.constant 0 : index
      %c0_27 = arith.constant 0 : index
      %45 = vector.load %arg9[%c0_26, %c0_27] : memref<256x1xf32, #tpu.memory_space<vmem>>, vector<256x1xf32>
      tpu.vector_store %arg9[%c0_26, %c0_27], %24 {strides = array<i32>} : memref<256x1xf32, #tpu.memory_space<vmem>>, vector<256x1xf32>,
    } else {
    }
    %c0_i32_3 = arith.constant 0 : i32
    %10 = arith.cmpi eq, %arg1, %c0_i32_3 : i32
    %11 = arith.extui %10 : i1 to i32
    %c0_i32_4 = arith.constant 0 : i32
    %12 = arith.cmpi ne, %11, %c0_i32_4 : i32
    scf.if %12 {
      %c0 = arith.constant 0 : index
      %c0_5 = arith.constant 0 : index
      %13 = vector.load %arg10[%c0, %c0_5] : memref<256x1xf32, #tpu.memory_space<vmem>>, vector<256x1xf32>
      %cst = arith.constant 0.000000e+00 : f32
      %14 = vector.broadcast %cst : f32 to vector<256x1xf32>
      %15 = arith.cmpf ogt, %13, %14 : vector<256x1xf32>
      %cst_6 = arith.constant 1.000000e+00 : f32
      %16 = vector.broadcast %cst_6 : f32 to vector<256x1xf32>
      %17 = arith.select %15, %13, %16 : vector<256x1xi1>, vector<256x1xf32>
      %c0_7 = arith.constant 0 : index
      %c0_8 = arith.constant 0 : index
      %18 = vector.load %arg11[%c0_7, %c0_8] : memref<256x128xf32, #tpu.memory_space<vmem>>, vector<256x128xf32>
      %19 = tpu.reciprocal %17 {approx = true} : vector<256x1xf32> -> vector<256x1xf32>
      %20 = vector.broadcast %19 : vector<256x1xf32> to vector<256x128xf32>
      %21 = arith.mulf %18, %20 : vector<256x128xf32>
      %c0_9 = arith.constant 0 : index
      %c0_10 = arith.constant 0 : index
      %22 = vector.load %arg8[%c0_9, %c0_10] : memref<256x128xf32, #tpu.memory_space<vmem>>, vector<256x128xf32>
      tpu.vector_store %arg8[%c0_9, %c0_10], %21 {strides = array<i32>} : memref<256x128xf32, #tpu.memory_space<vmem>>, vector<256x128xf32>,
    } else {
    }
    return
  }
  func.func @transform_0(%arg0: i32, %arg1: i32, %arg2: memref<1xi32, #tpu.memory_space<smem>>, %arg3: memref<1xi32, #tpu.memory_space<smem>>) -> (i32, i32) {
    %c0_i32 = arith.constant 0 : i32
    %c0_i32_0 = arith.constant 0 : i32
    return %arg0, %c0_i32 : i32, i32
  }
  func.func @transform_1(%arg0: i32, %arg1: i32, %arg2: memref<1xi32, #tpu.memory_space<smem>>, %arg3: memref<1xi32, #tpu.memory_space<smem>>) -> (i32, i32) {
    %c1_i32 = arith.constant 1 : i32
    %0 = arith.muli %arg0, %c1_i32 : i32
    %1 = arith.addi %0, %arg1 : i32
    %2 = arith.index_cast %1 : i32 to index
    %3 = memref.load %arg3[%2] : memref<1xi32, #tpu.memory_space<smem>>
    %c0_i32 = arith.constant 0 : i32
    %c0_i32_0 = arith.constant 0 : i32
    return %3, %c0_i32 : i32, i32
  }
  func.func @transform_2(%arg0: i32, %arg1: i32, %arg2: memref<1xi32, #tpu.memory_space<smem>>, %arg3: memref<1xi32, #tpu.memory_space<smem>>) -> (i32, i32) {
    %c1_i32 = arith.constant 1 : i32
    %0 = arith.muli %arg0, %c1_i32 : i32
    %1 = arith.addi %0, %arg1 : i32
    %2 = arith.index_cast %1 : i32 to index
    %3 = memref.load %arg3[%2] : memref<1xi32, #tpu.memory_space<smem>>
    %c0_i32 = arith.constant 0 : i32
    %c0_i32_0 = arith.constant 0 : i32
    return %3, %c0_i32 : i32, i32
  }
  func.func @transform_3(%arg0: i32, %arg1: i32, %arg2: memref<1xi32, #tpu.memory_space<smem>>, %arg3: memref<1xi32, #tpu.memory_space<smem>>) -> (i32, i32) {
    %c1_i32 = arith.constant 1 : i32
    %0 = arith.muli %arg0, %c1_i32 : i32
    %1 = arith.addi %0, %arg1 : i32
    %2 = arith.index_cast %1 : i32 to index
    %3 = memref.load %arg3[%2] : memref<1xi32, #tpu.memory_space<smem>>
    %c0_i32 = arith.constant 0 : i32
    return %arg0, %3 : i32, i32
  }
  func.func @transform_4(%arg0: i32, %arg1: i32, %arg2: memref<1xi32, #tpu.memory_space<smem>>, %arg3: memref<1xi32, #tpu.memory_space<smem>>) -> (i32, i32) {
    %c0_i32 = arith.constant 0 : i32
    %c0_i32_0 = arith.constant 0 : i32
    return %arg0, %c0_i32 : i32, i32
  }
}

</mosaic_0001>

<llo_original>
// kernel: tpu_custom_call.1
$region0: #{tpu_custom_call.1}
  #allocation0 [shape = 'u32[]', space=smem, size = 0x4, offset = 0x4, fixed_abs, tag = 'smem constant byte address 0x4 - core index']
  #allocation1 [shape = 'u32[144,128]{1,0:T(1,128)}', space=vmem, size = 0x12000, scoped, tag = 'internal scratch']
  #allocation2 [shape = 'f32[256,1]{1,0:T(8,128)}', space=vmem, size = 0x20000, scoped, tag = 'scratch operand']
  #allocation3 [shape = 'f32[256,1]{1,0:T(8,128)}', space=vmem, size = 0x20000, scoped, tag = 'scratch operand']
  #allocation4 [shape = 'f32[256,128]{1,0:T(8,128)}', space=vmem, size = 0x20000, scoped, tag = 'scratch operand']
  #allocation5 [shape = 's32[1]{0}', space=sflag, size = 0x4, scoped, tag = 'scoped memory for tpu_custom_call.1']
  #allocation6 [shape = 's32[1]{0:T(128)S(6)}', space=smem, size = 0x200, scoped, tag = 'prefetched SMEM operand 0']
  #allocation7 [shape = 's32[1]{0:T(128)S(6)}', space=smem, size = 0x200, scoped, tag = 'prefetched SMEM operand 1']
  %s0 = inlined_call_operand.<no memory space> [shape: s32[1], index: 0, kind: input, shape index: {}]
  %s1 = inlined_call_operand.<no memory space> [shape: s32[1], index: 1, kind: input, shape index: {}]
  %s2 = inlined_call_operand.hbm [shape: bf16[256,128], index: 2, kind: input, shape index: {}]
  %s3 = inlined_call_operand.hbm [shape: bf16[256,128], index: 3, kind: input, shape index: {}]
  %s4 = inlined_call_operand.hbm [shape: bf16[256,128], index: 4, kind: input, shape index: {}]
  %s5 = inlined_call_operand.hbm [shape: s8[256,256], index: 5, kind: input, shape index: {}]
  %s6 = inlined_call_operand.hbm [shape: f32[256,128], index: 6, kind: output, shape index: {}]
  %s7 = sld [smem:[#allocation0]]
  $region54: #{tpu_custom_call.1} parent=0
    _
  %s9 = ssub.s32 1, %s7
  %s10 = scalar_select 0, %s9, %s7
  %11 = sst [smem:[#allocation6]] %s0
  %12 = sst [smem:[#allocation7]] %s1
  $region1: #{tpu_custom_call.1} parent=0
    #allocation8 [shape = 'u8[65536]{0}', space=vmem, size = 0x10000, scoped, tag = 'input window, operand 2, single buffered']
    #allocation9 [shape = 's32[1]{0}', space=sflag, size = 0x4, scoped, tag = 'scoped memory for tpu_custom_call.1']
    #allocation10 [shape = 's32[1]{0}', space=sflag, size = 0x4, scoped, tag = 'scoped memory for tpu_custom_call.1']
    #allocation11 [shape = 'u8[65536]{0}', space=vmem, size = 0x10000, scoped, tag = 'input window, operand 3, single buffered']
    #allocation12 [shape = 's32[1]{0}', space=sflag, size = 0x4, scoped, tag = 'scoped memory for tpu_custom_call.1']
    #allocation13 [shape = 'u8[65536]{0}', space=vmem, size = 0x10000, scoped, tag = 'input window, operand 4, single buffered']
    #allocation14 [shape = 'u8[65536]{0}', space=vmem, size = 0x10000, scoped, tag = 'input window, operand 5, single buffered']
    #allocation15 [shape = 's32[1]{0}', space=sflag, size = 0x4, scoped, tag = 'scoped memory for tpu_custom_call.1']
    #allocation16 [shape = 'u8[131072]{0}', space=vmem, size = 0x20000, scoped, tag = 'output window, operand 0, single buffered']
    %13 = vsyncpa [#allocation9], 0
    %14 = vsyncpa [#allocation12], 0
    %15 = vsyncpa [#allocation15], 0
    %16 = vsyncpa [#allocation10], 0
    // Predicated region
    $region2: #{tpu_custom_call.1} parent=1 // pred_check
      _
    $region3: #{tpu_custom_call.1} parent=1 // pred_check_branch
      %18 = sbr.rel (0) target = $region5
    $region4: #{tpu_custom_call.1} parent=1 // pred_region
      %s20 = ssub.s32 2048, 2048
      %21 = vsyncadd [#allocation9], %s20
      %s22 = sshll.u32 [#allocation8], 4
      %s23 = int_to_ptr.vmem [resolvable:$true] %s22
      %28 = dma.hbm_to_vmem [thread:$0]  %s2, 2048, %s23, [#allocation9], 64, 64, 4
    $region5: #{tpu_custom_call.1} parent=1 // pred_fallthru
      _
    // Predicated region
    $region6: #{tpu_custom_call.1} parent=1 // pred_check
      _
    $region7: #{tpu_custom_call.1} parent=1 // pred_check_branch
      %30 = sbr.rel (0) target = $region9
    $region8: #{tpu_custom_call.1} parent=1 // pred_region
      %s31 = sadd.s32 0, 0
      %s32 = sld [smem:[#allocation7 + %s31]]
      %s33 = smul.u32 32, %s32
      %s35 = ssub.s32 2048, 2048
      %36 = vsyncadd [#allocation12], %s35
      %s37 = smul.addr %s33, 64
      %s38 = scalar_lea.hbm %s3, %s37
      %s39 = sshll.u32 [#allocation11], 4
      %s40 = int_to_ptr.vmem [resolvable:$true] %s39
      %45 = dma.hbm_to_vmem [thread:$0]  %s38, 2048, %s40, [#allocation12], 64, 64, 4
    $region9: #{tpu_custom_call.1} parent=1 // pred_fallthru
      _
    // Predicated region
    $region10: #{tpu_custom_call.1} parent=1 // pred_check
      _
    $region11: #{tpu_custom_call.1} parent=1 // pred_check_branch
      %47 = sbr.rel (0) target = $region13
    $region12: #{tpu_custom_call.1} parent=1 // pred_region
      %s48 = sadd.s32 0, 0
      %s49 = sld [smem:[#allocation7 + %s48]]
      %s50 = smul.u32 32, %s49
      %s52 = ssub.s32 2048, 2048
      %53 = vsyncadd [#allocation12], %s52
      %s54 = smul.addr %s50, 64
      %s55 = scalar_lea.hbm %s4, %s54
      %s56 = sshll.u32 [#allocation13], 4
      %s57 = int_to_ptr.vmem [resolvable:$true] %s56
      %62 = dma.hbm_to_vmem [thread:$0]  %s55, 2048, %s57, [#allocation12], 64, 64, 4
    $region13: #{tpu_custom_call.1} parent=1 // pred_fallthru
      _
    // Predicated region
    $region14: #{tpu_custom_call.1} parent=1 // pred_check
      _
    $region15: #{tpu_custom_call.1} parent=1 // pred_check_branch
      %64 = sbr.rel (0) target = $region17
    $region16: #{tpu_custom_call.1} parent=1 // pred_region
      %s65 = sadd.s32 0, 0
      %s66 = sld [smem:[#allocation7 + %s65]]
      %s67 = smul.u32 2, %s66
      %s69 = ssub.s32 2048, 2048
      %70 = vsyncadd [#allocation15], %s69
      %s71 = smul.addr %s67, 128
      %s72 = scalar_lea.hbm %s5, %s71
      %s73 = sshll.u32 [#allocation14], 4
      %s74 = int_to_ptr.vmem [resolvable:$true] %s73
      %79 = dma.hbm_to_vmem [thread:$0]  %s72, 2048, %s74, [#allocation15], 256, 256, 16
    $region17: #{tpu_custom_call.1} parent=1 // pred_fallthru
      _
    // Predicated region
    $region18: #{tpu_custom_call.1} parent=1 // pred_check
      _
    $region19: #{tpu_custom_call.1} parent=1 // pred_check_branch
      %81 = sbr.rel (0) target = $region21
    $region20: #{tpu_custom_call.1} parent=1 // pred_region
      %82 = dma.done [#allocation9], 2048
    $region21: #{tpu_custom_call.1} parent=1 // pred_fallthru
      _
    // Predicated region
    $region22: #{tpu_custom_call.1} parent=1 // pred_check
      _
    $region23: #{tpu_custom_call.1} parent=1 // pred_check_branch
      %84 = sbr.rel (0) target = $region25
    $region24: #{tpu_custom_call.1} parent=1 // pred_region
      %85 = dma.done [#allocation12], 2048
    $region25: #{tpu_custom_call.1} parent=1 // pred_fallthru
      _
    // Predicated region
    $region26: #{tpu_custom_call.1} parent=1 // pred_check
      _
    $region27: #{tpu_custom_call.1} parent=1 // pred_check_branch
      %87 = sbr.rel (0) target = $region29
    $region28: #{tpu_custom_call.1} parent=1 // pred_region
      %88 = dma.done [#allocation12], 2048
    $region29: #{tpu_custom_call.1} parent=1 // pred_fallthru
      _
    // Predicated region
    $region30: #{tpu_custom_call.1} parent=1 // pred_check
      _
    $region31: #{tpu_custom_call.1} parent=1 // pred_check_branch
      %90 = sbr.rel (0) target = $region33
    $region32: #{tpu_custom_call.1} parent=1 // pred_region
      %91 = dma.done [#allocation15], 2048
    $region33: #{tpu_custom_call.1} parent=1 // pred_fallthru
      _
    %s92 = sadd.s32 0, 0
    %s93 = sld [smem:[#allocation7 + %s92]]
    %s94 = smul.u32 32, %s93
    %s95 = sadd.s32 0, 0
    %s96 = sld [smem:[#allocation7 + %s95]]
    %s97 = smul.u32 32, %s96
    %s98 = sadd.s32 0, 0
    %s99 = sld [smem:[#allocation7 + %s98]]
    %s100 = smul.u32 2, %s99
    %p104 = scmp.eq.s32.totalorder 0, 0
    // Predicated region
    $region34: #{tpu_custom_call.1} parent=1 // pred_check
      %p105 = pneg %p104
    $region35: #{tpu_custom_call.1} parent=1 // pred_check_branch
      %107 = sbr.rel (%p105) target = $region37
    $region36: #{tpu_custom_call.1} parent=1 // pred_region
      %vm108 = vcmask 7168
      %109 = vst.msk [vmem:[#allocation2] sm:$0xff] %vm108, -inf
      %110 = vst.msk [vmem:[#allocation2 + $0x8] sm:$0xff] %vm108, -inf
      %111 = vst.msk [vmem:[#allocation2 + $0x10] sm:$0xff] %vm108, -inf
      %112 = vst.msk [vmem:[#allocation2 + $0x18] sm:$0xff] %vm108, -inf
      %113 = vst.msk [vmem:[#allocation2 + $0x20] sm:$0xff] %vm108, -inf
      %114 = vst.msk [vmem:[#allocation2 + $0x28] sm:$0xff] %vm108, -inf
      %115 = vst.msk [vmem:[#allocation2 + $0x30] sm:$0xff] %vm108, -inf
      %116 = vst.msk [vmem:[#allocation2 + $0x38] sm:$0xff] %vm108, -inf
      %117 = vst.msk [vmem:[#allocation2 + $0x40] sm:$0xff] %vm108, -inf
      %118 = vst.msk [vmem:[#allocation2 + $0x48] sm:$0xff] %vm108, -inf
      %119 = vst.msk [vmem:[#allocation2 + $0x50] sm:$0xff] %vm108, -inf
      %120 = vst.msk [vmem:[#allocation2 + $0x58] sm:$0xff] %vm108, -inf
      %121 = vst.msk [vmem:[#allocation2 + $0x60] sm:$0xff] %vm108, -inf
      %122 = vst.msk [vmem:[#allocation2 + $0x68] sm:$0xff] %vm108, -inf
      %123 = vst.msk [vmem:[#allocation2 + $0x70] sm:$0xff] %vm108, -inf
      %124 = vst.msk [vmem:[#allocation2 + $0x78] sm:$0xff] %vm108, -inf
      %125 = vst.msk [vmem:[#allocation2 + $0x80] sm:$0xff] %vm108, -inf
      %126 = vst.msk [vmem:[#allocation2 + $0x88] sm:$0xff] %vm108, -inf
      %127 = vst.msk [vmem:[#allocation2 + $0x90] sm:$0xff] %vm108, -inf
      %128 = vst.msk [vmem:[#allocation2 + $0x98] sm:$0xff] %vm108, -inf
      %129 = vst.msk [vmem:[#allocation2 + $0xa0] sm:$0xff] %vm108, -inf
      %130 = vst.msk [vmem:[#allocation2 + $0xa8] sm:$0xff] %vm108, -inf
      %131 = vst.msk [vmem:[#allocation2 + $0xb0] sm:$0xff] %vm108, -inf
      %132 = vst.msk [vmem:[#allocation2 + $0xb8] sm:$0xff] %vm108, -inf
      %133 = vst.msk [vmem:[#allocation2 + $0xc0] sm:$0xff] %vm108, -inf
      %134 = vst.msk [vmem:[#allocation2 + $0xc8] sm:$0xff] %vm108, -inf
      %135 = vst.msk [vmem:[#allocation2 + $0xd0] sm:$0xff] %vm108, -inf
      %136 = vst.msk [vmem:[#allocation2 + $0xd8] sm:$0xff] %vm108, -inf
      %137 = vst.msk [vmem:[#allocation2 + $0xe0] sm:$0xff] %vm108, -inf
      %138 = vst.msk [vmem:[#allocation2 + $0xe8] sm:$0xff] %vm108, -inf
      %139 = vst.msk [vmem:[#allocation2 + $0xf0] sm:$0xff] %vm108, -inf
      %140 = vst.msk [vmem:[#allocation2 + $0xf8] sm:$0xff] %vm108, -inf
      %141 = vst.msk [vmem:[#allocation3] sm:$0xff] %vm108, 0.0
      %142 = vst.msk [vmem:[#allocation3 + $0x8] sm:$0xff] %vm108, 0.0
      %143 = vst.msk [vmem:[#allocation3 + $0x10] sm:$0xff] %vm108, 0.0
      %144 = vst.msk [vmem:[#allocation3 + $0x18] sm:$0xff] %vm108, 0.0
      %145 = vst.msk [vmem:[#allocation3 + $0x20] sm:$0xff] %vm108, 0.0
      %146 = vst.msk [vmem:[#allocation3 + $0x28] sm:$0xff] %vm108, 0.0
      %147 = vst.msk [vmem:[#allocation3 + $0x30] sm:$0xff] %vm108, 0.0
      %148 = vst.msk [vmem:[#allocation3 + $0x38] sm:$0xff] %vm108, 0.0
      %149 = vst.msk [vmem:[#allocation3 + $0x40] sm:$0xff] %vm108, 0.0
      %150 = vst.msk [vmem:[#allocation3 + $0x48] sm:$0xff] %vm108, 0.0
      %151 = vst.msk [vmem:[#allocation3 + $0x50] sm:$0xff] %vm108, 0.0
      %152 = vst.msk [vmem:[#allocation3 + $0x58] sm:$0xff] %vm108, 0.0
      %153 = vst.msk [vmem:[#allocation3 + $0x60] sm:$0xff] %vm108, 0.0
      %154 = vst.msk [vmem:[#allocation3 + $0x68] sm:$0xff] %vm108, 0.0
      %155 = vst.msk [vmem:[#allocation3 + $0x70] sm:$0xff] %vm108, 0.0
      %156 = vst.msk [vmem:[#allocation3 + $0x78] sm:$0xff] %vm108, 0.0
      %157 = vst.msk [vmem:[#allocation3 + $0x80] sm:$0xff] %vm108, 0.0
      %158 = vst.msk [vmem:[#allocation3 + $0x88] sm:$0xff] %vm108, 0.0
      %159 = vst.msk [vmem:[#allocation3 + $0x90] sm:$0xff] %vm108, 0.0
      %160 = vst.msk [vmem:[#allocation3 + $0x98] sm:$0xff] %vm108, 0.0
      %161 = vst.msk [vmem:[#allocation3 + $0xa0] sm:$0xff] %vm108, 0.0
      %162 = vst.msk [vmem:[#allocation3 + $0xa8] sm:$0xff] %vm108, 0.0
      %163 = vst.msk [vmem:[#allocation3 + $0xb0] sm:$0xff] %vm108, 0.0
      %164 = vst.msk [vmem:[#allocation3 + $0xb8] sm:$0xff] %vm108, 0.0
      %165 = vst.msk [vmem:[#allocation3 + $0xc0] sm:$0xff] %vm108, 0.0
      %166 = vst.msk [vmem:[#allocation3 + $0xc8] sm:$0xff] %vm108, 0.0
      %167 = vst.msk [vmem:[#allocation3 + $0xd0] sm:$0xff] %vm108, 0.0
      %168 = vst.msk [vmem:[#allocation3 + $0xd8] sm:$0xff] %vm108, 0.0
      %169 = vst.msk [vmem:[#allocation3 + $0xe0] sm:$0xff] %vm108, 0.0
      %170 = vst.msk [vmem:[#allocation3 + $0xe8] sm:$0xff] %vm108, 0.0
      %171 = vst.msk [vmem:[#allocation3 + $0xf0] sm:$0xff] %vm108, 0.0
      %172 = vst.msk [vmem:[#allocation3 + $0xf8] sm:$0xff] %vm108, 0.0
      %173 = vst [vmem:[#allocation4] sm:$0xff] 0.0
      %174 = vst [vmem:[#allocation4 + $0x8] sm:$0xff] 0.0
      %175 = vst [vmem:[#allocation4 + $0x10] sm:$0xff] 0.0
      %176 = vst [vmem:[#allocation4 + $0x18] sm:$0xff] 0.0
      %177 = vst [vmem:[#allocation4 + $0x20] sm:$0xff] 0.0
      %178 = vst [vmem:[#allocation4 + $0x28] sm:$0xff] 0.0
      %179 = vst [vmem:[#allocation4 + $0x30] sm:$0xff] 0.0
      %180 = vst [vmem:[#allocation4 + $0x38] sm:$0xff] 0.0
      %181 = vst [vmem:[#allocation4 + $0x40] sm:$0xff] 0.0
      %182 = vst [vmem:[#allocation4 + $0x48] sm:$0xff] 0.0
      %183 = vst [vmem:[#allocation4 + $0x50] sm:$0xff] 0.0
      %184 = vst [vmem:[#allocation4 + $0x58] sm:$0xff] 0.0
      %185 = vst [vmem:[#allocation4 + $0x60] sm:$0xff] 0.0
      %186 = vst [vmem:[#allocation4 + $0x68] sm:$0xff] 0.0
      %187 = vst [vmem:[#allocation4 + $0x70] sm:$0xff] 0.0
      %188 = vst [vmem:[#allocation4 + $0x78] sm:$0xff] 0.0
      %189 = vst [vmem:[#allocation4 + $0x80] sm:$0xff] 0.0
      %190 = vst [vmem:[#allocation4 + $0x88] sm:$0xff] 0.0
      %191 = vst [vmem:[#allocation4 + $0x90] sm:$0xff] 0.0
      %192 = vst [vmem:[#allocation4 + $0x98] sm:$0xff] 0.0
      %193 = vst [vmem:[#allocation4 + $0xa0] sm:$0xff] 0.0
      %194 = vst [vmem:[#allocation4 + $0xa8] sm:$0xff] 0.0
      %195 = vst [vmem:[#allocation4 + $0xb0] sm:$0xff] 0.0
      %196 = vst [vmem:[#allocation4 + $0xb8] sm:$0xff] 0.0
      %197 = vst [vmem:[#allocation4 + $0xc0] sm:$0xff] 0.0
      %198 = vst [vmem:[#allocation4 + $0xc8] sm:$0xff] 0.0
      %199 = vst [vmem:[#allocation4 + $0xd0] sm:$0xff] 0.0
      %200 = vst [vmem:[#allocation4 + $0xd8] sm:$0xff] 0.0
      %201 = vst [vmem:[#allocation4 + $0xe0] sm:$0xff] 0.0
      %202 = vst [vmem:[#allocation4 + $0xe8] sm:$0xff] 0.0
      %203 = vst [vmem:[#allocation4 + $0xf0] sm:$0xff] 0.0
      %204 = vst [vmem:[#allocation4 + $0xf8] sm:$0xff] 0.0
    $region37: #{tpu_custom_call.1} parent=1 // pred_fallthru
      _
    %s205 = sadd.s32 0, 0
    %s206 = sld [smem:[#allocation6 + %s205]]
    %p207 = scmp.ne.s32.totalorder %s206, 0
    // Predicated region
    $region38: #{tpu_custom_call.1} parent=1 // pred_check
      %p208 = pneg %p207
    $region39: #{tpu_custom_call.1} parent=1 // pred_check_branch
      %210 = sbr.rel (%p208) target = $region41
    $region40: #{tpu_custom_call.1} parent=1 // pred_region
      %v211 = vld [vmem:[#allocation8] sm:$0xf]
      %v212 = vld [vmem:[#allocation8 + $0x4] sm:$0xf]
      %v213 = vld [vmem:[#allocation8 + $0x8] sm:$0xf]
      %v214 = vld [vmem:[#allocation8 + $0xc] sm:$0xf]
      %v215 = vld [vmem:[#allocation8 + $0x10] sm:$0xf]
      %v216 = vld [vmem:[#allocation8 + $0x14] sm:$0xf]
      %v217 = vld [vmem:[#allocation8 + $0x18] sm:$0xf]
      %v218 = vld [vmem:[#allocation8 + $0x1c] sm:$0xf]
      %v219 = vld [vmem:[#allocation8 + $0x20] sm:$0xf]
      %v220 = vld [vmem:[#allocation8 + $0x24] sm:$0xf]
      %v221 = vld [vmem:[#allocation8 + $0x28] sm:$0xf]
      %v222 = vld [vmem:[#allocation8 + $0x2c] sm:$0xf]
      %v223 = vld [vmem:[#allocation8 + $0x30] sm:$0xf]
      %v224 = vld [vmem:[#allocation8 + $0x34] sm:$0xf]
      %v225 = vld [vmem:[#allocation8 + $0x38] sm:$0xf]
      %v226 = vld [vmem:[#allocation8 + $0x3c] sm:$0xf]
      %v227 = vld [vmem:[#allocation8 + $0x40] sm:$0xf]
      %v228 = vld [vmem:[#allocation8 + $0x44] sm:$0xf]
      %v229 = vld [vmem:[#allocation8 + $0x48] sm:$0xf]
      %v230 = vld [vmem:[#allocation8 + $0x4c] sm:$0xf]
      %v231 = vld [vmem:[#allocation8 + $0x50] sm:$0xf]
      %v232 = vld [vmem:[#allocation8 + $0x54] sm:$0xf]
      %v233 = vld [vmem:[#allocation8 + $0x58] sm:$0xf]
      %v234 = vld [vmem:[#allocation8 + $0x5c] sm:$0xf]
      %v235 = vld [vmem:[#allocation8 + $0x60] sm:$0xf]
      %v236 = vld [vmem:[#allocation8 + $0x64] sm:$0xf]
      %v237 = vld [vmem:[#allocation8 + $0x68] sm:$0xf]
      %v238 = vld [vmem:[#allocation8 + $0x6c] sm:$0xf]
      %v239 = vld [vmem:[#allocation8 + $0x70] sm:$0xf]
      %v240 = vld [vmem:[#allocation8 + $0x74] sm:$0xf]
      %v241 = vld [vmem:[#allocation8 + $0x78] sm:$0xf]
      %v242 = vld [vmem:[#allocation8 + $0x7c] sm:$0xf]
      %v243 = vld [vmem:[#allocation11] sm:$0xf]
      %v244 = vld [vmem:[#allocation11 + $0x4] sm:$0xf]
      %v245 = vld [vmem:[#allocation11 + $0x8] sm:$0xf]
      %v246 = vld [vmem:[#allocation11 + $0xc] sm:$0xf]
      %v247 = vld [vmem:[#allocation11 + $0x10] sm:$0xf]
      %v248 = vld [vmem:[#allocation11 + $0x14] sm:$0xf]
      %v249 = vld [vmem:[#allocation11 + $0x18] sm:$0xf]
      %v250 = vld [vmem:[#allocation11 + $0x1c] sm:$0xf]
      %v251 = vld [vmem:[#allocation11 + $0x20] sm:$0xf]
      %v252 = vld [vmem:[#allocation11 + $0x24] sm:$0xf]
      %v253 = vld [vmem:[#allocation11 + $0x28] sm:$0xf]
      %v254 = vld [vmem:[#allocation11 + $0x2c] sm:$0xf]
      %v255 = vld [vmem:[#allocation11 + $0x30] sm:$0xf]
      %v256 = vld [vmem:[#allocation11 + $0x34] sm:$0xf]
      %v257 = vld [vmem:[#allocation11 + $0x38] sm:$0xf]
      %v258 = vld [vmem:[#allocation11 + $0x3c] sm:$0xf]
      %v259 = vld [vmem:[#allocation11 + $0x40] sm:$0xf]
      %v260 = vld [vmem:[#allocation11 + $0x44] sm:$0xf]
      %v261 = vld [vmem:[#allocation11 + $0x48] sm:$0xf]
      %v262 = vld [vmem:[#allocation11 + $0x4c] sm:$0xf]
      %v263 = vld [vmem:[#allocation11 + $0x50] sm:$0xf]
      %v264 = vld [vmem:[#allocation11 + $0x54] sm:$0xf]
      %v265 = vld [vmem:[#allocation11 + $0x58] sm:$0xf]
      %v266 = vld [vmem:[#allocation11 + $0x5c] sm:$0xf]
      %v267 = vld [vmem:[#allocation11 + $0x60] sm:$0xf]
      %v268 = vld [vmem:[#allocation11 + $0x64] sm:$0xf]
      %v269 = vld [vmem:[#allocation11 + $0x68] sm:$0xf]
      %v270 = vld [vmem:[#allocation11 + $0x6c] sm:$0xf]
      %v271 = vld [vmem:[#allocation11 + $0x70] sm:$0xf]
      %v272 = vld [vmem:[#allocation11 + $0x74] sm:$0xf]
      %v273 = vld [vmem:[#allocation11 + $0x78] sm:$0xf]
      %v274 = vld [vmem:[#allocation11 + $0x7c] sm:$0xf]
      %v307 = vunpack.c.l.b16 %v211
      %v308 = vunpack.c.l.b16 %v212
      %v309 = vunpack.c.l.b16 %v213
      %v310 = vunpack.c.l.b16 %v214
      %v311 = vunpack.c.l.b16 %v215
      %v312 = vunpack.c.l.b16 %v216
      %v313 = vunpack.c.l.b16 %v217
      %v314 = vunpack.c.l.b16 %v218
      %v315 = vunpack.c.l.b16 %v219
      %v316 = vunpack.c.l.b16 %v220
      %v317 = vunpack.c.l.b16 %v221
      %v318 = vunpack.c.l.b16 %v222
      %v319 = vunpack.c.l.b16 %v223
      %v320 = vunpack.c.l.b16 %v224
      %v321 = vunpack.c.l.b16 %v225
      %v322 = vunpack.c.l.b16 %v226
      %v323 = vunpack.c.l.b16 %v227
      %v324 = vunpack.c.l.b16 %v228
      %v325 = vunpack.c.l.b16 %v229
      %v326 = vunpack.c.l.b16 %v230
      %v327 = vunpack.c.l.b16 %v231
      %v328 = vunpack.c.l.b16 %v232
      %v329 = vunpack.c.l.b16 %v233
      %v330 = vunpack.c.l.b16 %v234
      %v331 = vunpack.c.l.b16 %v235
      %v332 = vunpack.c.l.b16 %v236
      %v333 = vunpack.c.l.b16 %v237
      %v334 = vunpack.c.l.b16 %v238
      %v335 = vunpack.c.l.b16 %v239
      %v336 = vunpack.c.l.b16 %v240
      %v337 = vunpack.c.l.b16 %v241
      %v338 = vunpack.c.l.b16 %v242
      %v339 = vpack.c.b16 %v308, %v307
      %v340 = vpack.c.b16 %v310, %v309
      %v341 = vpack.c.b16 %v312, %v311
      %v342 = vpack.c.b16 %v314, %v313
      %v343 = vpack.c.b16 %v316, %v315
      %v344 = vpack.c.b16 %v318, %v317
      %v345 = vpack.c.b16 %v320, %v319
      %v346 = vpack.c.b16 %v322, %v321
      %v347 = vpack.c.b16 %v324, %v323
      %v348 = vpack.c.b16 %v326, %v325
      %v349 = vpack.c.b16 %v328, %v327
      %v350 = vpack.c.b16 %v330, %v329
      %v351 = vpack.c.b16 %v332, %v331
      %v352 = vpack.c.b16 %v334, %v333
      %v353 = vpack.c.b16 %v336, %v335
      %v354 = vpack.c.b16 %v338, %v337
      %v403 = vunpack.c.l.b16 %v243
      %v404 = vunpack.c.l.b16 %v244
      %v405 = vunpack.c.l.b16 %v245
      %v406 = vunpack.c.l.b16 %v246
      %v407 = vunpack.c.l.b16 %v247
      %v408 = vunpack.c.l.b16 %v248
      %v409 = vunpack.c.l.b16 %v249
      %v410 = vunpack.c.l.b16 %v250
      %v411 = vunpack.c.l.b16 %v251
      %v412 = vunpack.c.l.b16 %v252
      %v413 = vunpack.c.l.b16 %v253
      %v414 = vunpack.c.l.b16 %v254
      %v415 = vunpack.c.l.b16 %v255
      %v416 = vunpack.c.l.b16 %v256
      %v417 = vunpack.c.l.b16 %v257
      %v418 = vunpack.c.l.b16 %v258
      %v419 = vunpack.c.l.b16 %v259
      %v420 = vunpack.c.l.b16 %v260
      %v421 = vunpack.c.l.b16 %v261
      %v422 = vunpack.c.l.b16 %v262
      %v423 = vunpack.c.l.b16 %v263
      %v424 = vunpack.c.l.b16 %v264
      %v425 = vunpack.c.l.b16 %v265
      %v426 = vunpack.c.l.b16 %v266
      %v427 = vunpack.c.l.b16 %v267
      %v428 = vunpack.c.l.b16 %v268
      %v429 = vunpack.c.l.b16 %v269
      %v430 = vunpack.c.l.b16 %v270
      %v431 = vunpack.c.l.b16 %v271
      %v432 = vunpack.c.l.b16 %v272
      %v433 = vunpack.c.l.b16 %v273
      %v434 = vunpack.c.l.b16 %v274
      %v435 = vpack.c.b16 %v404, %v403
      %v436 = vpack.c.b16 %v406, %v405
      %v437 = vpack.c.b16 %v408, %v407
      %v438 = vpack.c.b16 %v410, %v409
      %v439 = vpack.c.b16 %v412, %v411
      %v440 = vpack.c.b16 %v414, %v413
      %v441 = vpack.c.b16 %v416, %v415
      %v442 = vpack.c.b16 %v418, %v417
      %v443 = vpack.c.b16 %v420, %v419
      %v444 = vpack.c.b16 %v422, %v421
      %v445 = vpack.c.b16 %v424, %v423
      %v446 = vpack.c.b16 %v426, %v425
      %v447 = vpack.c.b16 %v428, %v427
      %v448 = vpack.c.b16 %v430, %v429
      %v449 = vpack.c.b16 %v432, %v431
      %v450 = vpack.c.b16 %v434, %v433
      %467 = vmatprep.subr.bf16.mxu0 0
      %468 = vmatpush1.bf16.xpose.msra.mxu0 %v435
      %469 = vmatprep.subr.bf16.mxu0 0
      %470 = vmatpush1.bf16.xpose.msra.mxu0 %v436
      %471 = vmatprep.subr.bf16.mxu0 0
      %472 = vmatpush1.bf16.xpose.msra.mxu0 %v437
      %473 = vmatprep.subr.bf16.mxu0 0
      %474 = vmatpush1.bf16.xpose.msra.mxu0 %v438
      %475 = vmatprep.subr.bf16.mxu0 0
      %476 = vmatpush1.bf16.xpose.msra.mxu0 %v439
      %477 = vmatprep.subr.bf16.mxu0 0
      %478 = vmatpush1.bf16.xpose.msra.mxu0 %v440
      %479 = vmatprep.subr.bf16.mxu0 0
      %480 = vmatpush1.bf16.xpose.msra.mxu0 %v441
      %481 = vmatprep.subr.bf16.mxu0 0
      %482 = vmatpush1.bf16.xpose.msra.mxu0 %v442
      %483 = vmatprep.subr.bf16.mxu0 0
      %484 = vmatpush1.bf16.xpose.msra.mxu0 %v443
      %485 = vmatprep.subr.bf16.mxu0 0
      %486 = vmatpush1.bf16.xpose.msra.mxu0 %v444
      %487 = vmatprep.subr.bf16.mxu0 0
      %488 = vmatpush1.bf16.xpose.msra.mxu0 %v445
      %489 = vmatprep.subr.bf16.mxu0 0
      %490 = vmatpush1.bf16.xpose.msra.mxu0 %v446
      %491 = vmatprep.subr.bf16.mxu0 0
      %492 = vmatpush1.bf16.xpose.msra.mxu0 %v447
      %493 = vmatprep.subr.bf16.mxu0 0
      %494 = vmatpush1.bf16.xpose.msra.mxu0 %v448
      %495 = vmatprep.subr.bf16.mxu0 0
      %496 = vmatpush1.bf16.xpose.msra.mxu0 %v449
      %497 = vmatprep.subr.bf16.mxu0 0
      %498 = vmatpush1.bf16.xpose.msra.mxu0 %v450
      %499 = vmatprep.mubr.bf16.mxu0 0
      %500 = vmatmul.mubr.bf16.gmra.mrb[0].mxu0 %v339
      %v501 = vpop.f32.mrb[0].mxu0
      %v502 = vadd.f32 0.0, %v501
      %v503 = vpop.f32.mrb[0].mxu0
      %v504 = vadd.f32 0.0, %v503
      %v505 = vpop.f32.mrb[0].mxu0
      %v506 = vadd.f32 0.0, %v505
      %v507 = vpop.f32.mrb[0].mxu0
      %v508 = vadd.f32 0.0, %v507
      %509 = vmatprep.mubr.bf16.mxu0 0
      %510 = vmatmul.mubr.bf16.gmra.mrb[0].mxu0 %v340
      %v511 = vpop.f32.mrb[0].mxu0
      %v512 = vadd.f32 0.0, %v511
      %v513 = vpop.f32.mrb[0].mxu0
      %v514 = vadd.f32 0.0, %v513
      %v515 = vpop.f32.mrb[0].mxu0
      %v516 = vadd.f32 0.0, %v515
      %v517 = vpop.f32.mrb[0].mxu0
      %v518 = vadd.f32 0.0, %v517
      %519 = vmatprep.mubr.bf16.mxu0 0
      %520 = vmatmul.mubr.bf16.gmra.mrb[0].mxu0 %v341
      %v521 = vpop.f32.mrb[0].mxu0
      %v522 = vadd.f32 0.0, %v521
      %v523 = vpop.f32.mrb[0].mxu0
      %v524 = vadd.f32 0.0, %v523
      %v525 = vpop.f32.mrb[0].mxu0
      %v526 = vadd.f32 0.0, %v525
      %v527 = vpop.f32.mrb[0].mxu0
      %v528 = vadd.f32 0.0, %v527
      %529 = vmatprep.mubr.bf16.mxu0 0
      %530 = vmatmul.mubr.bf16.gmra.mrb[0].mxu0 %v342
      %v531 = vpop.f32.mrb[0].mxu0
      %v532 = vadd.f32 0.0, %v531
      %v533 = vpop.f32.mrb[0].mxu0
      %v534 = vadd.f32 0.0, %v533
      %v535 = vpop.f32.mrb[0].mxu0
      %v536 = vadd.f32 0.0, %v535
      %v537 = vpop.f32.mrb[0].mxu0
      %v538 = vadd.f32 0.0, %v537
      %539 = vmatprep.mubr.bf16.mxu0 0
      %540 = vmatmul.mubr.bf16.gmra.mrb[0].mxu0 %v343
      %v541 = vpop.f32.mrb[0].mxu0
      %v542 = vadd.f32 0.0, %v541
      %v543 = vpop.f32.mrb[0].mxu0
      %v544 = vadd.f32 0.0, %v543
      %v545 = vpop.f32.mrb[0].mxu0
      %v546 = vadd.f32 0.0, %v545
      %v547 = vpop.f32.mrb[0].mxu0
      %v548 = vadd.f32 0.0, %v547
      %549 = vmatprep.mubr.bf16.mxu0 0
      %550 = vmatmul.mubr.bf16.gmra.mrb[0].mxu0 %v344
      %v551 = vpop.f32.mrb[0].mxu0
      %v552 = vadd.f32 0.0, %v551
      %v553 = vpop.f32.mrb[0].mxu0
      %v554 = vadd.f32 0.0, %v553
      %v555 = vpop.f32.mrb[0].mxu0
      %v556 = vadd.f32 0.0, %v555
      %v557 = vpop.f32.mrb[0].mxu0
      %v558 = vadd.f32 0.0, %v557
      %559 = vmatprep.mubr.bf16.mxu0 0
      %560 = vmatmul.mubr.bf16.gmra.mrb[0].mxu0 %v345
      %v561 = vpop.f32.mrb[0].mxu0
      %v562 = vadd.f32 0.0, %v561
      %v563 = vpop.f32.mrb[0].mxu0
      %v564 = vadd.f32 0.0, %v563
      %v565 = vpop.f32.mrb[0].mxu0
      %v566 = vadd.f32 0.0, %v565
      %v567 = vpop.f32.mrb[0].mxu0
      %v568 = vadd.f32 0.0, %v567
      %569 = vmatprep.mubr.bf16.mxu0 0
      %570 = vmatmul.mubr.bf16.gmra.mrb[0].mxu0 %v346
      %v571 = vpop.f32.mrb[0].mxu0
      %v572 = vadd.f32 0.0, %v571
      %v573 = vpop.f32.mrb[0].mxu0
      %v574 = vadd.f32 0.0, %v573
      %v575 = vpop.f32.mrb[0].mxu0
      %v576 = vadd.f32 0.0, %v575
      %v577 = vpop.f32.mrb[0].mxu0
      %v578 = vadd.f32 0.0, %v577
      %579 = vmatprep.mubr.bf16.mxu0 0
      %580 = vmatmul.mubr.bf16.gmra.mrb[0].mxu0 %v347
      %v581 = vpop.f32.mrb[0].mxu0
      %v582 = vadd.f32 0.0, %v581
      %v583 = vpop.f32.mrb[0].mxu0
      %v584 = vadd.f32 0.0, %v583
      %v585 = vpop.f32.mrb[0].mxu0
      %v586 = vadd.f32 0.0, %v585
      %v587 = vpop.f32.mrb[0].mxu0
      %v588 = vadd.f32 0.0, %v587
      %589 = vmatprep.mubr.bf16.mxu0 0
      %590 = vmatmul.mubr.bf16.gmra.mrb[0].mxu0 %v348
      %v591 = vpop.f32.mrb[0].mxu0
      %v592 = vadd.f32 0.0, %v591
      %v593 = vpop.f32.mrb[0].mxu0
      %v594 = vadd.f32 0.0, %v593
      %v595 = vpop.f32.mrb[0].mxu0
      %v596 = vadd.f32 0.0, %v595
      %v597 = vpop.f32.mrb[0].mxu0
      %v598 = vadd.f32 0.0, %v597
      %599 = vmatprep.mubr.bf16.mxu0 0
      %600 = vmatmul.mubr.bf16.gmra.mrb[0].mxu0 %v349
      %v601 = vpop.f32.mrb[0].mxu0
      %v602 = vadd.f32 0.0, %v601
      %v603 = vpop.f32.mrb[0].mxu0
      %v604 = vadd.f32 0.0, %v603
      %v605 = vpop.f32.mrb[0].mxu0
      %v606 = vadd.f32 0.0, %v605
      %v607 = vpop.f32.mrb[0].mxu0
      %v608 = vadd.f32 0.0, %v607
      %609 = vmatprep.mubr.bf16.mxu0 0
      %610 = vmatmul.mubr.bf16.gmra.mrb[0].mxu0 %v350
      %v611 = vpop.f32.mrb[0].mxu0
      %v612 = vadd.f32 0.0, %v611
      %v613 = vpop.f32.mrb[0].mxu0
      %v614 = vadd.f32 0.0, %v613
      %v615 = vpop.f32.mrb[0].mxu0
      %v616 = vadd.f32 0.0, %v615
      %v617 = vpop.f32.mrb[0].mxu0
      %v618 = vadd.f32 0.0, %v617
      %619 = vmatprep.mubr.bf16.mxu0 0
      %620 = vmatmul.mubr.bf16.gmra.mrb[0].mxu0 %v351
      %v621 = vpop.f32.mrb[0].mxu0
      %v622 = vadd.f32 0.0, %v621
      %v623 = vpop.f32.mrb[0].mxu0
      %v624 = vadd.f32 0.0, %v623
      %v625 = vpop.f32.mrb[0].mxu0
      %v626 = vadd.f32 0.0, %v625
      %v627 = vpop.f32.mrb[0].mxu0
      %v628 = vadd.f32 0.0, %v627
      %629 = vmatprep.mubr.bf16.mxu0 0
      %630 = vmatmul.mubr.bf16.gmra.mrb[0].mxu0 %v352
      %v631 = vpop.f32.mrb[0].mxu0
      %v632 = vadd.f32 0.0, %v631
      %v633 = vpop.f32.mrb[0].mxu0
      %v634 = vadd.f32 0.0, %v633
      %v635 = vpop.f32.mrb[0].mxu0
      %v636 = vadd.f32 0.0, %v635
      %v637 = vpop.f32.mrb[0].mxu0
      %v638 = vadd.f32 0.0, %v637
      %639 = vmatprep.mubr.bf16.mxu0 0
      %640 = vmatmul.mubr.bf16.gmra.mrb[0].mxu0 %v353
      %v641 = vpop.f32.mrb[0].mxu0
      %v642 = vadd.f32 0.0, %v641
      %v643 = vpop.f32.mrb[0].mxu0
      %v644 = vadd.f32 0.0, %v643
      %v645 = vpop.f32.mrb[0].mxu0
      %v646 = vadd.f32 0.0, %v645
      %v647 = vpop.f32.mrb[0].mxu0
      %v648 = vadd.f32 0.0, %v647
      %649 = vmatprep.mubr.bf16.mxu0 0
      %650 = vmatmul.mubr.bf16.gmra.mrb[0].mxu0 %v354
      %v651 = vpop.f32.mrb[0].mxu0
      %v652 = vadd.f32 0.0, %v651
      %v653 = vpop.f32.mrb[0].mxu0
      %v654 = vadd.f32 0.0, %v653
      %v655 = vpop.f32.mrb[0].mxu0
      %v656 = vadd.f32 0.0, %v655
      %v657 = vpop.f32.mrb[0].mxu0
      %v658 = vadd.f32 0.0, %v657
      %659 = vdwg.mxu0
      %v660 = vld [vmem:[#allocation14] sm:$0xff]
      %v661 = vld [vmem:[#allocation14 + $0x8] sm:$0xff]
      %v662 = vld [vmem:[#allocation14 + $0x10] sm:$0xff]
      %v663 = vld [vmem:[#allocation14 + $0x18] sm:$0xff]
      %v664 = vld [vmem:[#allocation14 + $0x20] sm:$0xff]
      %v665 = vld [vmem:[#allocation14 + $0x28] sm:$0xff]
      %v666 = vld [vmem:[#allocation14 + $0x30] sm:$0xff]
      %v667 = vld [vmem:[#allocation14 + $0x38] sm:$0xff]
      %v668 = vld [vmem:[#allocation14 + $0x40] sm:$0xff]
      %v669 = vld [vmem:[#allocation14 + $0x48] sm:$0xff]
      %v670 = vld [vmem:[#allocation14 + $0x50] sm:$0xff]
      %v671 = vld [vmem:[#allocation14 + $0x58] sm:$0xff]
      %v672 = vld [vmem:[#allocation14 + $0x60] sm:$0xff]
      %v673 = vld [vmem:[#allocation14 + $0x68] sm:$0xff]
      %v674 = vld [vmem:[#allocation14 + $0x70] sm:$0xff]
      %v675 = vld [vmem:[#allocation14 + $0x78] sm:$0xff]
      %vm676 = vnez %v660
      %vm677 = vnez %v661
      %vm678 = vnez %v662
      %vm679 = vnez %v663
      %vm680 = vnez %v664
      %vm681 = vnez %v665
      %vm682 = vnez %v666
      %vm683 = vnez %v667
      %vm684 = vnez %v668
      %vm685 = vnez %v669
      %vm686 = vnez %v670
      %vm687 = vnez %v671
      %vm688 = vnez %v672
      %vm689 = vnez %v673
      %vm690 = vnez %v674
      %vm691 = vnez %v675
      %v692 = vsel %vm676, 16843009, 0
      %v693 = vsel %vm677, 16843009, 0
      %v694 = vsel %vm678, 16843009, 0
      %v695 = vsel %vm679, 16843009, 0
      %v696 = vsel %vm680, 16843009, 0
      %v697 = vsel %vm681, 16843009, 0
      %v698 = vsel %vm682, 16843009, 0
      %v699 = vsel %vm683, 16843009, 0
      %v700 = vsel %vm684, 16843009, 0
      %v701 = vsel %vm685, 16843009, 0
      %v702 = vsel %vm686, 16843009, 0
      %v703 = vsel %vm687, 16843009, 0
      %v704 = vsel %vm688, 16843009, 0
      %v705 = vsel %vm689, 16843009, 0
      %v706 = vsel %vm690, 16843009, 0
      %v707 = vsel %vm691, 16843009, 0
      %v708 = vunpack.c.0.s8 %v692
      %v709 = vunpack.c.0.s8 %v693
      %v710 = vunpack.c.1.s8 %v692
      %v711 = vunpack.c.1.s8 %v693
      %v712 = vunpack.c.2.s8 %v692
      %v713 = vunpack.c.2.s8 %v693
      %v714 = vunpack.c.3.s8 %v692
      %v715 = vunpack.c.3.s8 %v693
      %v716 = vunpack.c.0.s8 %v694
      %v717 = vunpack.c.0.s8 %v695
      %v718 = vunpack.c.1.s8 %v694
      %v719 = vunpack.c.1.s8 %v695
      %v720 = vunpack.c.2.s8 %v694
      %v721 = vunpack.c.2.s8 %v695
      %v722 = vunpack.c.3.s8 %v694
      %v723 = vunpack.c.3.s8 %v695
      %v724 = vunpack.c.0.s8 %v696
      %v725 = vunpack.c.0.s8 %v697
      %v726 = vunpack.c.1.s8 %v696
      %v727 = vunpack.c.1.s8 %v697
      %v728 = vunpack.c.2.s8 %v696
      %v729 = vunpack.c.2.s8 %v697
      %v730 = vunpack.c.3.s8 %v696
      %v731 = vunpack.c.3.s8 %v697
      %v732 = vunpack.c.0.s8 %v698
      %v733 = vunpack.c.0.s8 %v699
      %v734 = vunpack.c.1.s8 %v698
      %v735 = vunpack.c.1.s8 %v699
      %v736 = vunpack.c.2.s8 %v698
      %v737 = vunpack.c.2.s8 %v699
      %v738 = vunpack.c.3.s8 %v698
      %v739 = vunpack.c.3.s8 %v699
      %v740 = vunpack.c.0.s8 %v700
      %v741 = vunpack.c.0.s8 %v701
      %v742 = vunpack.c.1.s8 %v700
      %v743 = vunpack.c.1.s8 %v701
      %v744 = vunpack.c.2.s8 %v700
      %v745 = vunpack.c.2.s8 %v701
      %v746 = vunpack.c.3.s8 %v700
      %v747 = vunpack.c.3.s8 %v701
      %v748 = vunpack.c.0.s8 %v702
      %v749 = vunpack.c.0.s8 %v703
      %v750 = vunpack.c.1.s8 %v702
      %v751 = vunpack.c.1.s8 %v703
      %v752 = vunpack.c.2.s8 %v702
      %v753 = vunpack.c.2.s8 %v703
      %v754 = vunpack.c.3.s8 %v702
      %v755 = vunpack.c.3.s8 %v703
      %v756 = vunpack.c.0.s8 %v704
      %v757 = vunpack.c.0.s8 %v705
      %v758 = vunpack.c.1.s8 %v704
      %v759 = vunpack.c.1.s8 %v705
      %v760 = vunpack.c.2.s8 %v704
      %v761 = vunpack.c.2.s8 %v705
      %v762 = vunpack.c.3.s8 %v704
      %v763 = vunpack.c.3.s8 %v705
      %v764 = vunpack.c.0.s8 %v706
      %v765 = vunpack.c.0.s8 %v707
      %v766 = vunpack.c.1.s8 %v706
      %v767 = vunpack.c.1.s8 %v707
      %v768 = vunpack.c.2.s8 %v706
      %v769 = vunpack.c.2.s8 %v707
      %v770 = vunpack.c.3.s8 %v706
      %v771 = vunpack.c.3.s8 %v707
      %v772 = vpack.c.b16 %v709, %v708
      %v773 = vpack.c.b8 %v772, %v772
      %v774 = vpack.c.b16 %v711, %v710
      %v775 = vpack.c.b8 %v774, %v774
      %v776 = vpack.c.b16 %v713, %v712
      %v777 = vpack.c.b8 %v776, %v776
      %v778 = vpack.c.b16 %v715, %v714
      %v779 = vpack.c.b8 %v778, %v778
      %v780 = vpack.c.b16 %v717, %v716
      %v781 = vpack.c.b8 %v780, %v780
      %v782 = vpack.c.b16 %v719, %v718
      %v783 = vpack.c.b8 %v782, %v782
      %v784 = vpack.c.b16 %v721, %v720
      %v785 = vpack.c.b8 %v784, %v784
      %v786 = vpack.c.b16 %v723, %v722
      %v787 = vpack.c.b8 %v786, %v786
      %v788 = vpack.c.b16 %v725, %v724
      %v789 = vpack.c.b8 %v788, %v788
      %v790 = vpack.c.b16 %v727, %v726
      %v791 = vpack.c.b8 %v790, %v790
      %v792 = vpack.c.b16 %v729, %v728
      %v793 = vpack.c.b8 %v792, %v792
      %v794 = vpack.c.b16 %v731, %v730
      %v795 = vpack.c.b8 %v794, %v794
      %v796 = vpack.c.b16 %v733, %v732
      %v797 = vpack.c.b8 %v796, %v796
      %v798 = vpack.c.b16 %v735, %v734
      %v799 = vpack.c.b8 %v798, %v798
      %v800 = vpack.c.b16 %v737, %v736
      %v801 = vpack.c.b8 %v800, %v800
      %v802 = vpack.c.b16 %v739, %v738
      %v803 = vpack.c.b8 %v802, %v802
      %v804 = vpack.c.b16 %v741, %v740
      %v805 = vpack.c.b8 %v804, %v804
      %v806 = vpack.c.b16 %v743, %v742
      %v807 = vpack.c.b8 %v806, %v806
      %v808 = vpack.c.b16 %v745, %v744
      %v809 = vpack.c.b8 %v808, %v808
      %v810 = vpack.c.b16 %v747, %v746
      %v811 = vpack.c.b8 %v810, %v810
      %v812 = vpack.c.b16 %v749, %v748
      %v813 = vpack.c.b8 %v812, %v812
      %v814 = vpack.c.b16 %v751, %v750
      %v815 = vpack.c.b8 %v814, %v814
      %v816 = vpack.c.b16 %v753, %v752
      %v817 = vpack.c.b8 %v816, %v816
      %v818 = vpack.c.b16 %v755, %v754
      %v819 = vpack.c.b8 %v818, %v818
      %v820 = vpack.c.b16 %v757, %v756
      %v821 = vpack.c.b8 %v820, %v820
      %v822 = vpack.c.b16 %v759, %v758
      %v823 = vpack.c.b8 %v822, %v822
      %v824 = vpack.c.b16 %v761, %v760
      %v825 = vpack.c.b8 %v824, %v824
      %v826 = vpack.c.b16 %v763, %v762
      %v827 = vpack.c.b8 %v826, %v826
      %v828 = vpack.c.b16 %v765, %v764
      %v829 = vpack.c.b8 %v828, %v828
      %v830 = vpack.c.b16 %v767, %v766
      %v831 = vpack.c.b8 %v830, %v830
      %v832 = vpack.c.b16 %v769, %v768
      %v833 = vpack.c.b8 %v832, %v832
      %v834 = vpack.c.b16 %v771, %v770
      %v835 = vpack.c.b8 %v834, %v834
      %vm836 = vnez %v773
      %vm837 = vnez %v775
      %vm838 = vnez %v777
      %vm839 = vnez %v779
      %vm840 = vnez %v781
      %vm841 = vnez %v783
      %vm842 = vnez %v785
      %vm843 = vnez %v787
      %vm844 = vnez %v789
      %vm845 = vnez %v791
      %vm846 = vnez %v793
      %vm847 = vnez %v795
      %vm848 = vnez %v797
      %vm849 = vnez %v799
      %vm850 = vnez %v801
      %vm851 = vnez %v803
      %vm852 = vnez %v805
      %vm853 = vnez %v807
      %vm854 = vnez %v809
      %vm855 = vnez %v811
      %vm856 = vnez %v813
      %vm857 = vnez %v815
      %vm858 = vnez %v817
      %vm859 = vnez %v819
      %vm860 = vnez %v821
      %vm861 = vnez %v823
      %vm862 = vnez %v825
      %vm863 = vnez %v827
      %vm864 = vnez %v829
      %vm865 = vnez %v831
      %vm866 = vnez %v833
      %vm867 = vnez %v835
      %v868 = vsel %vm836, 16843009, 0
      %v869 = vsel %vm837, 16843009, 0
      %v870 = vsel %vm838, 16843009, 0
      %v871 = vsel %vm839, 16843009, 0
      %v872 = vsel %vm840, 16843009, 0
      %v873 = vsel %vm841, 16843009, 0
      %v874 = vsel %vm842, 16843009, 0
      %v875 = vsel %vm843, 16843009, 0
      %v876 = vsel %vm844, 16843009, 0
      %v877 = vsel %vm845, 16843009, 0
      %v878 = vsel %vm846, 16843009, 0
      %v879 = vsel %vm847, 16843009, 0
      %v880 = vsel %vm848, 16843009, 0
      %v881 = vsel %vm849, 16843009, 0
      %v882 = vsel %vm850, 16843009, 0
      %v883 = vsel %vm851, 16843009, 0
      %v884 = vsel %vm852, 16843009, 0
      %v885 = vsel %vm853, 16843009, 0
      %v886 = vsel %vm854, 16843009, 0
      %v887 = vsel %vm855, 16843009, 0
      %v888 = vsel %vm856, 16843009, 0
      %v889 = vsel %vm857, 16843009, 0
      %v890 = vsel %vm858, 16843009, 0
      %v891 = vsel %vm859, 16843009, 0
      %v892 = vsel %vm860, 16843009, 0
      %v893 = vsel %vm861, 16843009, 0
      %v894 = vsel %vm862, 16843009, 0
      %v895 = vsel %vm863, 16843009, 0
      %v896 = vsel %vm864, 16843009, 0
      %v897 = vsel %vm865, 16843009, 0
      %v898 = vsel %vm866, 16843009, 0
      %v899 = vsel %vm867, 16843009, 0
      %v900 = vunpack.c.0.s8 %v868
      %v901 = vunpack.c.1.s8 %v868
      %v902 = vunpack.c.0.s8 %v869
      %v903 = vunpack.c.1.s8 %v869
      %v904 = vunpack.c.0.s8 %v870
      %v905 = vunpack.c.1.s8 %v870
      %v906 = vunpack.c.0.s8 %v871
      %v907 = vunpack.c.1.s8 %v871
      %v908 = vunpack.c.0.s8 %v872
      %v909 = vunpack.c.1.s8 %v872
      %v910 = vunpack.c.0.s8 %v873
      %v911 = vunpack.c.1.s8 %v873
      %v912 = vunpack.c.0.s8 %v874
      %v913 = vunpack.c.1.s8 %v874
      %v914 = vunpack.c.0.s8 %v875
      %v915 = vunpack.c.1.s8 %v875
      %v916 = vunpack.c.0.s8 %v876
      %v917 = vunpack.c.1.s8 %v876
      %v918 = vunpack.c.0.s8 %v877
      %v919 = vunpack.c.1.s8 %v877
      %v920 = vunpack.c.0.s8 %v878
      %v921 = vunpack.c.1.s8 %v878
      %v922 = vunpack.c.0.s8 %v879
      %v923 = vunpack.c.1.s8 %v879
      %v924 = vunpack.c.0.s8 %v880
      %v925 = vunpack.c.1.s8 %v880
      %v926 = vunpack.c.0.s8 %v881
      %v927 = vunpack.c.1.s8 %v881
      %v928 = vunpack.c.0.s8 %v882
      %v929 = vunpack.c.1.s8 %v882
      %v930 = vunpack.c.0.s8 %v883
      %v931 = vunpack.c.1.s8 %v883
      %v932 = vunpack.c.0.s8 %v884
      %v933 = vunpack.c.1.s8 %v884
      %v934 = vunpack.c.0.s8 %v885
      %v935 = vunpack.c.1.s8 %v885
      %v936 = vunpack.c.0.s8 %v886
      %v937 = vunpack.c.1.s8 %v886
      %v938 = vunpack.c.0.s8 %v887
      %v939 = vunpack.c.1.s8 %v887
      %v940 = vunpack.c.0.s8 %v888
      %v941 = vunpack.c.1.s8 %v888
      %v942 = vunpack.c.0.s8 %v889
      %v943 = vunpack.c.1.s8 %v889
      %v944 = vunpack.c.0.s8 %v890
      %v945 = vunpack.c.1.s8 %v890
      %v946 = vunpack.c.0.s8 %v891
      %v947 = vunpack.c.1.s8 %v891
      %v948 = vunpack.c.0.s8 %v892
      %v949 = vunpack.c.1.s8 %v892
      %v950 = vunpack.c.0.s8 %v893
      %v951 = vunpack.c.1.s8 %v893
      %v952 = vunpack.c.0.s8 %v894
      %v953 = vunpack.c.1.s8 %v894
      %v954 = vunpack.c.0.s8 %v895
      %v955 = vunpack.c.1.s8 %v895
      %v956 = vunpack.c.0.s8 %v896
      %v957 = vunpack.c.1.s8 %v896
      %v958 = vunpack.c.0.s8 %v897
      %v959 = vunpack.c.1.s8 %v897
      %v960 = vunpack.c.0.s8 %v898
      %v961 = vunpack.c.1.s8 %v898
      %v962 = vunpack.c.0.s8 %v899
      %v963 = vunpack.c.1.s8 %v899
      %vm964 = vcmp.ne.s32.totalorder %v900, 0
      %vm965 = vcmp.ne.s32.totalorder %v901, 0
      %vm966 = vcmp.ne.s32.totalorder %v902, 0
      %vm967 = vcmp.ne.s32.totalorder %v903, 0
      %vm968 = vcmp.ne.s32.totalorder %v904, 0
      %vm969 = vcmp.ne.s32.totalorder %v905, 0
      %vm970 = vcmp.ne.s32.totalorder %v906, 0
      %vm971 = vcmp.ne.s32.totalorder %v907, 0
      %vm972 = vcmp.ne.s32.totalorder %v908, 0
      %vm973 = vcmp.ne.s32.totalorder %v909, 0
      %vm974 = vcmp.ne.s32.totalorder %v910, 0
      %vm975 = vcmp.ne.s32.totalorder %v911, 0
      %vm976 = vcmp.ne.s32.totalorder %v912, 0
      %vm977 = vcmp.ne.s32.totalorder %v913, 0
      %vm978 = vcmp.ne.s32.totalorder %v914, 0
      %vm979 = vcmp.ne.s32.totalorder %v915, 0
      %vm980 = vcmp.ne.s32.totalorder %v916, 0
      %vm981 = vcmp.ne.s32.totalorder %v917, 0
      %vm982 = vcmp.ne.s32.totalorder %v918, 0
      %vm983 = vcmp.ne.s32.totalorder %v919, 0
      %vm984 = vcmp.ne.s32.totalorder %v920, 0
      %vm985 = vcmp.ne.s32.totalorder %v921, 0
      %vm986 = vcmp.ne.s32.totalorder %v922, 0
      %vm987 = vcmp.ne.s32.totalorder %v923, 0
      %vm988 = vcmp.ne.s32.totalorder %v924, 0
      %vm989 = vcmp.ne.s32.totalorder %v925, 0
      %vm990 = vcmp.ne.s32.totalorder %v926, 0
      %vm991 = vcmp.ne.s32.totalorder %v927, 0
      %vm992 = vcmp.ne.s32.totalorder %v928, 0
      %vm993 = vcmp.ne.s32.totalorder %v929, 0
      %vm994 = vcmp.ne.s32.totalorder %v930, 0
      %vm995 = vcmp.ne.s32.totalorder %v931, 0
      %vm996 = vcmp.ne.s32.totalorder %v932, 0
      %vm997 = vcmp.ne.s32.totalorder %v933, 0
      %vm998 = vcmp.ne.s32.totalorder %v934, 0
      %vm999 = vcmp.ne.s32.totalorder %v935, 0
      %vm1000 = vcmp.ne.s32.totalorder %v936, 0
      %vm1001 = vcmp.ne.s32.totalorder %v937, 0
      %vm1002 = vcmp.ne.s32.totalorder %v938, 0
      %vm1003 = vcmp.ne.s32.totalorder %v939, 0
      %vm1004 = vcmp.ne.s32.totalorder %v940, 0
      %vm1005 = vcmp.ne.s32.totalorder %v941, 0
      %vm1006 = vcmp.ne.s32.totalorder %v942, 0
      %vm1007 = vcmp.ne.s32.totalorder %v943, 0
      %vm1008 = vcmp.ne.s32.totalorder %v944, 0
      %vm1009 = vcmp.ne.s32.totalorder %v945, 0
      %vm1010 = vcmp.ne.s32.totalorder %v946, 0
      %vm1011 = vcmp.ne.s32.totalorder %v947, 0
      %vm1012 = vcmp.ne.s32.totalorder %v948, 0
      %vm1013 = vcmp.ne.s32.totalorder %v949, 0
      %vm1014 = vcmp.ne.s32.totalorder %v950, 0
      %vm1015 = vcmp.ne.s32.totalorder %v951, 0
      %vm1016 = vcmp.ne.s32.totalorder %v952, 0
      %vm1017 = vcmp.ne.s32.totalorder %v953, 0
      %vm1018 = vcmp.ne.s32.totalorder %v954, 0
      %vm1019 = vcmp.ne.s32.totalorder %v955, 0
      %vm1020 = vcmp.ne.s32.totalorder %v956, 0
      %vm1021 = vcmp.ne.s32.totalorder %v957, 0
      %vm1022 = vcmp.ne.s32.totalorder %v958, 0
      %vm1023 = vcmp.ne.s32.totalorder %v959, 0
      %vm1024 = vcmp.ne.s32.totalorder %v960, 0
      %vm1025 = vcmp.ne.s32.totalorder %v961, 0
      %vm1026 = vcmp.ne.s32.totalorder %v962, 0
      %vm1027 = vcmp.ne.s32.totalorder %v963, 0
      %v1028 = vsel %vm964, %v502, -1000000.0
      %v1029 = vsel %vm965, %v504, -1000000.0
      %v1030 = vsel %vm966, %v506, -1000000.0
      %v1031 = vsel %vm967, %v508, -1000000.0
      %v1032 = vsel %vm968, %v512, -1000000.0
      %v1033 = vsel %vm969, %v514, -1000000.0
      %v1034 = vsel %vm970, %v516, -1000000.0
      %v1035 = vsel %vm971, %v518, -1000000.0
      %v1036 = vsel %vm972, %v522, -1000000.0
      %v1037 = vsel %vm973, %v524, -1000000.0
      %v1038 = vsel %vm974, %v526, -1000000.0
      %v1039 = vsel %vm975, %v528, -1000000.0
      %v1040 = vsel %vm976, %v532, -1000000.0
      %v1041 = vsel %vm977, %v534, -1000000.0
      %v1042 = vsel %vm978, %v536, -1000000.0
      %v1043 = vsel %vm979, %v538, -1000000.0
      %v1044 = vsel %vm980, %v542, -1000000.0
      %v1045 = vsel %vm981, %v544, -1000000.0
      %v1046 = vsel %vm982, %v546, -1000000.0
      %v1047 = vsel %vm983, %v548, -1000000.0
      %v1048 = vsel %vm984, %v552, -1000000.0
      %v1049 = vsel %vm985, %v554, -1000000.0
      %v1050 = vsel %vm986, %v556, -1000000.0
      %v1051 = vsel %vm987, %v558, -1000000.0
      %v1052 = vsel %vm988, %v562, -1000000.0
      %v1053 = vsel %vm989, %v564, -1000000.0
      %v1054 = vsel %vm990, %v566, -1000000.0
      %v1055 = vsel %vm991, %v568, -1000000.0
      %v1056 = vsel %vm992, %v572, -1000000.0
      %v1057 = vsel %vm993, %v574, -1000000.0
      %v1058 = vsel %vm994, %v576, -1000000.0
      %v1059 = vsel %vm995, %v578, -1000000.0
      %v1060 = vsel %vm996, %v582, -1000000.0
      %v1061 = vsel %vm997, %v584, -1000000.0
      %v1062 = vsel %vm998, %v586, -1000000.0
      %v1063 = vsel %vm999, %v588, -1000000.0
      %v1064 = vsel %vm1000, %v592, -1000000.0
      %v1065 = vsel %vm1001, %v594, -1000000.0
      %v1066 = vsel %vm1002, %v596, -1000000.0
      %v1067 = vsel %vm1003, %v598, -1000000.0
      %v1068 = vsel %vm1004, %v602, -1000000.0
      %v1069 = vsel %vm1005, %v604, -1000000.0
      %v1070 = vsel %vm1006, %v606, -1000000.0
      %v1071 = vsel %vm1007, %v608, -1000000.0
      %v1072 = vsel %vm1008, %v612, -1000000.0
      %v1073 = vsel %vm1009, %v614, -1000000.0
      %v1074 = vsel %vm1010, %v616, -1000000.0
      %v1075 = vsel %vm1011, %v618, -1000000.0
      %v1076 = vsel %vm1012, %v622, -1000000.0
      %v1077 = vsel %vm1013, %v624, -1000000.0
      %v1078 = vsel %vm1014, %v626, -1000000.0
      %v1079 = vsel %vm1015, %v628, -1000000.0
      %v1080 = vsel %vm1016, %v632, -1000000.0
      %v1081 = vsel %vm1017, %v634, -1000000.0
      %v1082 = vsel %vm1018, %v636, -1000000.0
      %v1083 = vsel %vm1019, %v638, -1000000.0
      %v1084 = vsel %vm1020, %v642, -1000000.0
      %v1085 = vsel %vm1021, %v644, -1000000.0
      %v1086 = vsel %vm1022, %v646, -1000000.0
      %v1087 = vsel %vm1023, %v648, -1000000.0
      %v1088 = vsel %vm1024, %v652, -1000000.0
      %v1089 = vsel %vm1025, %v654, -1000000.0
      %v1090 = vsel %vm1026, %v656, -1000000.0
      %v1091 = vsel %vm1027, %v658, -1000000.0
      %v1092 = vld [vmem:[#allocation2] sm:$0xff]
      %v1093 = vld [vmem:[#allocation2 + $0x8] sm:$0xff]
      %v1094 = vld [vmem:[#allocation2 + $0x10] sm:$0xff]
      %v1095 = vld [vmem:[#allocation2 + $0x18] sm:$0xff]
      %v1096 = vld [vmem:[#allocation2 + $0x20] sm:$0xff]
      %v1097 = vld [vmem:[#allocation2 + $0x28] sm:$0xff]
      %v1098 = vld [vmem:[#allocation2 + $0x30] sm:$0xff]
      %v1099 = vld [vmem:[#allocation2 + $0x38] sm:$0xff]
      %v1100 = vld [vmem:[#allocation2 + $0x40] sm:$0xff]
      %v1101 = vld [vmem:[#allocation2 + $0x48] sm:$0xff]
      %v1102 = vld [vmem:[#allocation2 + $0x50] sm:$0xff]
      %v1103 = vld [vmem:[#allocation2 + $0x58] sm:$0xff]
      %v1104 = vld [vmem:[#allocation2 + $0x60] sm:$0xff]
      %v1105 = vld [vmem:[#allocation2 + $0x68] sm:$0xff]
      %v1106 = vld [vmem:[#allocation2 + $0x70] sm:$0xff]
      %v1107 = vld [vmem:[#allocation2 + $0x78] sm:$0xff]
      %v1108 = vld [vmem:[#allocation2 + $0x80] sm:$0xff]
      %v1109 = vld [vmem:[#allocation2 + $0x88] sm:$0xff]
      %v1110 = vld [vmem:[#allocation2 + $0x90] sm:$0xff]
      %v1111 = vld [vmem:[#allocation2 + $0x98] sm:$0xff]
      %v1112 = vld [vmem:[#allocation2 + $0xa0] sm:$0xff]
      %v1113 = vld [vmem:[#allocation2 + $0xa8] sm:$0xff]
      %v1114 = vld [vmem:[#allocation2 + $0xb0] sm:$0xff]
      %v1115 = vld [vmem:[#allocation2 + $0xb8] sm:$0xff]
      %v1116 = vld [vmem:[#allocation2 + $0xc0] sm:$0xff]
      %v1117 = vld [vmem:[#allocation2 + $0xc8] sm:$0xff]
      %v1118 = vld [vmem:[#allocation2 + $0xd0] sm:$0xff]
      %v1119 = vld [vmem:[#allocation2 + $0xd8] sm:$0xff]
      %v1120 = vld [vmem:[#allocation2 + $0xe0] sm:$0xff]
      %v1121 = vld [vmem:[#allocation2 + $0xe8] sm:$0xff]
      %v1122 = vld [vmem:[#allocation2 + $0xf0] sm:$0xff]
      %v1123 = vld [vmem:[#allocation2 + $0xf8] sm:$0xff]
      %v1124 = vmax.f32 %v1028, %v1029
      %1125 = vmax.xlane.f32.xlu0 %v1124
      %v1126 = vpop.xlane.xlu0 %1125
      %v1127 = vmax.f32 %v1030, %v1031
      %1128 = vmax.xlane.f32.xlu0 %v1127
      %v1129 = vpop.xlane.xlu0 %1128
      %v1130 = vmax.f32 %v1032, %v1033
      %1131 = vmax.xlane.f32.xlu0 %v1130
      %v1132 = vpop.xlane.xlu0 %1131
      %v1133 = vmax.f32 %v1034, %v1035
      %1134 = vmax.xlane.f32.xlu0 %v1133
      %v1135 = vpop.xlane.xlu0 %1134
      %v1136 = vmax.f32 %v1036, %v1037
      %1137 = vmax.xlane.f32.xlu0 %v1136
      %v1138 = vpop.xlane.xlu0 %1137
      %v1139 = vmax.f32 %v1038, %v1039
      %1140 = vmax.xlane.f32.xlu0 %v1139
      %v1141 = vpop.xlane.xlu0 %1140
      %v1142 = vmax.f32 %v1040, %v1041
      %1143 = vmax.xlane.f32.xlu0 %v1142
      %v1144 = vpop.xlane.xlu0 %1143
      %v1145 = vmax.f32 %v1042, %v1043
      %1146 = vmax.xlane.f32.xlu0 %v1145
      %v1147 = vpop.xlane.xlu0 %1146
      %v1148 = vmax.f32 %v1044, %v1045
      %1149 = vmax.xlane.f32.xlu0 %v1148
      %v1150 = vpop.xlane.xlu0 %1149
      %v1151 = vmax.f32 %v1046, %v1047
      %1152 = vmax.xlane.f32.xlu0 %v1151
      %v1153 = vpop.xlane.xlu0 %1152
      %v1154 = vmax.f32 %v1048, %v1049
      %1155 = vmax.xlane.f32.xlu0 %v1154
      %v1156 = vpop.xlane.xlu0 %1155
      %v1157 = vmax.f32 %v1050, %v1051
      %1158 = vmax.xlane.f32.xlu0 %v1157
      %v1159 = vpop.xlane.xlu0 %1158
      %v1160 = vmax.f32 %v1052, %v1053
      %1161 = vmax.xlane.f32.xlu0 %v1160
      %v1162 = vpop.xlane.xlu0 %1161
      %v1163 = vmax.f32 %v1054, %v1055
      %1164 = vmax.xlane.f32.xlu0 %v1163
      %v1165 = vpop.xlane.xlu0 %1164
      %v1166 = vmax.f32 %v1056, %v1057
      %1167 = vmax.xlane.f32.xlu0 %v1166
      %v1168 = vpop.xlane.xlu0 %1167
      %v1169 = vmax.f32 %v1058, %v1059
      %1170 = vmax.xlane.f32.xlu0 %v1169
      %v1171 = vpop.xlane.xlu0 %1170
      %v1172 = vmax.f32 %v1060, %v1061
      %1173 = vmax.xlane.f32.xlu0 %v1172
      %v1174 = vpop.xlane.xlu0 %1173
      %v1175 = vmax.f32 %v1062, %v1063
      %1176 = vmax.xlane.f32.xlu0 %v1175
      %v1177 = vpop.xlane.xlu0 %1176
      %v1178 = vmax.f32 %v1064, %v1065
      %1179 = vmax.xlane.f32.xlu0 %v1178
      %v1180 = vpop.xlane.xlu0 %1179
      %v1181 = vmax.f32 %v1066, %v1067
      %1182 = vmax.xlane.f32.xlu0 %v1181
      %v1183 = vpop.xlane.xlu0 %1182
      %v1184 = vmax.f32 %v1068, %v1069
      %1185 = vmax.xlane.f32.xlu0 %v1184
      %v1186 = vpop.xlane.xlu0 %1185
      %v1187 = vmax.f32 %v1070, %v1071
      %1188 = vmax.xlane.f32.xlu0 %v1187
      %v1189 = vpop.xlane.xlu0 %1188
      %v1190 = vmax.f32 %v1072, %v1073
      %1191 = vmax.xlane.f32.xlu0 %v1190
      %v1192 = vpop.xlane.xlu0 %1191
      %v1193 = vmax.f32 %v1074, %v1075
      %1194 = vmax.xlane.f32.xlu0 %v1193
      %v1195 = vpop.xlane.xlu0 %1194
      %v1196 = vmax.f32 %v1076, %v1077
      %1197 = vmax.xlane.f32.xlu0 %v1196
      %v1198 = vpop.xlane.xlu0 %1197
      %v1199 = vmax.f32 %v1078, %v1079
      %1200 = vmax.xlane.f32.xlu0 %v1199
      %v1201 = vpop.xlane.xlu0 %1200
      %v1202 = vmax.f32 %v1080, %v1081
      %1203 = vmax.xlane.f32.xlu0 %v1202
      %v1204 = vpop.xlane.xlu0 %1203
      %v1205 = vmax.f32 %v1082, %v1083
      %1206 = vmax.xlane.f32.xlu0 %v1205
      %v1207 = vpop.xlane.xlu0 %1206
      %v1208 = vmax.f32 %v1084, %v1085
      %1209 = vmax.xlane.f32.xlu0 %v1208
      %v1210 = vpop.xlane.xlu0 %1209
      %v1211 = vmax.f32 %v1086, %v1087
      %1212 = vmax.xlane.f32.xlu0 %v1211
      %v1213 = vpop.xlane.xlu0 %1212
      %v1214 = vmax.f32 %v1088, %v1089
      %1215 = vmax.xlane.f32.xlu0 %v1214
      %v1216 = vpop.xlane.xlu0 %1215
      %v1217 = vmax.f32 %v1090, %v1091
      %1218 = vmax.xlane.f32.xlu0 %v1217
      %v1219 = vpop.xlane.xlu0 %1218
      %v1220 = vmax.f32 %v1092, %v1126
      %v1221 = vmax.f32 %v1093, %v1129
      %v1222 = vmax.f32 %v1094, %v1132
      %v1223 = vmax.f32 %v1095, %v1135
      %v1224 = vmax.f32 %v1096, %v1138
      %v1225 = vmax.f32 %v1097, %v1141
      %v1226 = vmax.f32 %v1098, %v1144
      %v1227 = vmax.f32 %v1099, %v1147
      %v1228 = vmax.f32 %v1100, %v1150
      %v1229 = vmax.f32 %v1101, %v1153
      %v1230 = vmax.f32 %v1102, %v1156
      %v1231 = vmax.f32 %v1103, %v1159
      %v1232 = vmax.f32 %v1104, %v1162
      %v1233 = vmax.f32 %v1105, %v1165
      %v1234 = vmax.f32 %v1106, %v1168
      %v1235 = vmax.f32 %v1107, %v1171
      %v1236 = vmax.f32 %v1108, %v1174
      %v1237 = vmax.f32 %v1109, %v1177
      %v1238 = vmax.f32 %v1110, %v1180
      %v1239 = vmax.f32 %v1111, %v1183
      %v1240 = vmax.f32 %v1112, %v1186
      %v1241 = vmax.f32 %v1113, %v1189
      %v1242 = vmax.f32 %v1114, %v1192
      %v1243 = vmax.f32 %v1115, %v1195
      %v1244 = vmax.f32 %v1116, %v1198
      %v1245 = vmax.f32 %v1117, %v1201
      %v1246 = vmax.f32 %v1118, %v1204
      %v1247 = vmax.f32 %v1119, %v1207
      %v1248 = vmax.f32 %v1120, %v1210
      %v1249 = vmax.f32 %v1121, %v1213
      %v1250 = vmax.f32 %v1122, %v1216
      %v1251 = vmax.f32 %v1123, %v1219
      %v1252 = vsub.f32 %v1092, %v1220
      %v1253 = vsub.f32 %v1093, %v1221
      %v1254 = vsub.f32 %v1094, %v1222
      %v1255 = vsub.f32 %v1095, %v1223
      %v1256 = vsub.f32 %v1096, %v1224
      %v1257 = vsub.f32 %v1097, %v1225
      %v1258 = vsub.f32 %v1098, %v1226
      %v1259 = vsub.f32 %v1099, %v1227
      %v1260 = vsub.f32 %v1100, %v1228
      %v1261 = vsub.f32 %v1101, %v1229
      %v1262 = vsub.f32 %v1102, %v1230
      %v1263 = vsub.f32 %v1103, %v1231
      %v1264 = vsub.f32 %v1104, %v1232
      %v1265 = vsub.f32 %v1105, %v1233
      %v1266 = vsub.f32 %v1106, %v1234
      %v1267 = vsub.f32 %v1107, %v1235
      %v1268 = vsub.f32 %v1108, %v1236
      %v1269 = vsub.f32 %v1109, %v1237
      %v1270 = vsub.f32 %v1110, %v1238
      %v1271 = vsub.f32 %v1111, %v1239
      %v1272 = vsub.f32 %v1112, %v1240
      %v1273 = vsub.f32 %v1113, %v1241
      %v1274 = vsub.f32 %v1114, %v1242
      %v1275 = vsub.f32 %v1115, %v1243
      %v1276 = vsub.f32 %v1116, %v1244
      %v1277 = vsub.f32 %v1117, %v1245
      %v1278 = vsub.f32 %v1118, %v1246
      %v1279 = vsub.f32 %v1119, %v1247
      %v1280 = vsub.f32 %v1120, %v1248
      %v1281 = vsub.f32 %v1121, %v1249
      %v1282 = vsub.f32 %v1122, %v1250
      %v1283 = vsub.f32 %v1123, %v1251
      %v1284 = vmul.f32 %v1252, 1.442695
      %v1285 = vpow.pop %v1284
      %v1286 = vmul.f32 %v1253, 1.442695
      %v1287 = vpow.pop %v1286
      %v1288 = vmul.f32 %v1254, 1.442695
      %v1289 = vpow.pop %v1288
      %v1290 = vmul.f32 %v1255, 1.442695
      %v1291 = vpow.pop %v1290
      %v1292 = vmul.f32 %v1256, 1.442695
      %v1293 = vpow.pop %v1292
      %v1294 = vmul.f32 %v1257, 1.442695
      %v1295 = vpow.pop %v1294
      %v1296 = vmul.f32 %v1258, 1.442695
      %v1297 = vpow.pop %v1296
      %v1298 = vmul.f32 %v1259, 1.442695
      %v1299 = vpow.pop %v1298
      %v1300 = vmul.f32 %v1260, 1.442695
      %v1301 = vpow.pop %v1300
      %v1302 = vmul.f32 %v1261, 1.442695
      %v1303 = vpow.pop %v1302
      %v1304 = vmul.f32 %v1262, 1.442695
      %v1305 = vpow.pop %v1304
      %v1306 = vmul.f32 %v1263, 1.442695
      %v1307 = vpow.pop %v1306
      %v1308 = vmul.f32 %v1264, 1.442695
      %v1309 = vpow.pop %v1308
      %v1310 = vmul.f32 %v1265, 1.442695
      %v1311 = vpow.pop %v1310
      %v1312 = vmul.f32 %v1266, 1.442695
      %v1313 = vpow.pop %v1312
      %v1314 = vmul.f32 %v1267, 1.442695
      %v1315 = vpow.pop %v1314
      %v1316 = vmul.f32 %v1268, 1.442695
      %v1317 = vpow.pop %v1316
      %v1318 = vmul.f32 %v1269, 1.442695
      %v1319 = vpow.pop %v1318
      %v1320 = vmul.f32 %v1270, 1.442695
      %v1321 = vpow.pop %v1320
      %v1322 = vmul.f32 %v1271, 1.442695
      %v1323 = vpow.pop %v1322
      %v1324 = vmul.f32 %v1272, 1.442695
      %v1325 = vpow.pop %v1324
      %v1326 = vmul.f32 %v1273, 1.442695
      %v1327 = vpow.pop %v1326
      %v1328 = vmul.f32 %v1274, 1.442695
      %v1329 = vpow.pop %v1328
      %v1330 = vmul.f32 %v1275, 1.442695
      %v1331 = vpow.pop %v1330
      %v1332 = vmul.f32 %v1276, 1.442695
      %v1333 = vpow.pop %v1332
      %v1334 = vmul.f32 %v1277, 1.442695
      %v1335 = vpow.pop %v1334
      %v1336 = vmul.f32 %v1278, 1.442695
      %v1337 = vpow.pop %v1336
      %v1338 = vmul.f32 %v1279, 1.442695
      %v1339 = vpow.pop %v1338
      %v1340 = vmul.f32 %v1280, 1.442695
      %v1341 = vpow.pop %v1340
      %v1342 = vmul.f32 %v1281, 1.442695
      %v1343 = vpow.pop %v1342
      %v1344 = vmul.f32 %v1282, 1.442695
      %v1345 = vpow.pop %v1344
      %v1346 = vmul.f32 %v1283, 1.442695
      %v1347 = vpow.pop %v1346
      %1349 = vset.pattern.permute.xlu0 0
      %1350 = vperm.xlu0 %1349, %v1220
      %v1351 = vpop.permute.xlu0 %1350
      %1354 = vset.pattern.permute.xlu0 0
      %1355 = vperm.xlu0 %1354, %v1221
      %v1356 = vpop.permute.xlu0 %1355
      %1359 = vset.pattern.permute.xlu0 0
      %1360 = vperm.xlu0 %1359, %v1222
      %v1361 = vpop.permute.xlu0 %1360
      %1364 = vset.pattern.permute.xlu0 0
      %1365 = vperm.xlu0 %1364, %v1223
      %v1366 = vpop.permute.xlu0 %1365
      %1369 = vset.pattern.permute.xlu0 0
      %1370 = vperm.xlu0 %1369, %v1224
      %v1371 = vpop.permute.xlu0 %1370
      %1374 = vset.pattern.permute.xlu0 0
      %1375 = vperm.xlu0 %1374, %v1225
      %v1376 = vpop.permute.xlu0 %1375
      %1379 = vset.pattern.permute.xlu0 0
      %1380 = vperm.xlu0 %1379, %v1226
      %v1381 = vpop.permute.xlu0 %1380
      %1384 = vset.pattern.permute.xlu0 0
      %1385 = vperm.xlu0 %1384, %v1227
      %v1386 = vpop.permute.xlu0 %1385
      %1389 = vset.pattern.permute.xlu0 0
      %1390 = vperm.xlu0 %1389, %v1228
      %v1391 = vpop.permute.xlu0 %1390
      %1394 = vset.pattern.permute.xlu0 0
      %1395 = vperm.xlu0 %1394, %v1229
      %v1396 = vpop.permute.xlu0 %1395
      %1399 = vset.pattern.permute.xlu0 0
      %1400 = vperm.xlu0 %1399, %v1230
      %v1401 = vpop.permute.xlu0 %1400
      %1404 = vset.pattern.permute.xlu0 0
      %1405 = vperm.xlu0 %1404, %v1231
      %v1406 = vpop.permute.xlu0 %1405
      %1409 = vset.pattern.permute.xlu0 0
      %1410 = vperm.xlu0 %1409, %v1232
      %v1411 = vpop.permute.xlu0 %1410
      %1414 = vset.pattern.permute.xlu0 0
      %1415 = vperm.xlu0 %1414, %v1233
      %v1416 = vpop.permute.xlu0 %1415
      %1419 = vset.pattern.permute.xlu0 0
      %1420 = vperm.xlu0 %1419, %v1234
      %v1421 = vpop.permute.xlu0 %1420
      %1424 = vset.pattern.permute.xlu0 0
      %1425 = vperm.xlu0 %1424, %v1235
      %v1426 = vpop.permute.xlu0 %1425
      %1429 = vset.pattern.permute.xlu0 0
      %1430 = vperm.xlu0 %1429, %v1236
      %v1431 = vpop.permute.xlu0 %1430
      %1434 = vset.pattern.permute.xlu0 0
      %1435 = vperm.xlu0 %1434, %v1237
      %v1436 = vpop.permute.xlu0 %1435
      %1439 = vset.pattern.permute.xlu0 0
      %1440 = vperm.xlu0 %1439, %v1238
      %v1441 = vpop.permute.xlu0 %1440
      %1444 = vset.pattern.permute.xlu0 0
      %1445 = vperm.xlu0 %1444, %v1239
      %v1446 = vpop.permute.xlu0 %1445
      %1449 = vset.pattern.permute.xlu0 0
      %1450 = vperm.xlu0 %1449, %v1240
      %v1451 = vpop.permute.xlu0 %1450
      %1454 = vset.pattern.permute.xlu0 0
      %1455 = vperm.xlu0 %1454, %v1241
      %v1456 = vpop.permute.xlu0 %1455
      %1459 = vset.pattern.permute.xlu0 0
      %1460 = vperm.xlu0 %1459, %v1242
      %v1461 = vpop.permute.xlu0 %1460
      %1464 = vset.pattern.permute.xlu0 0
      %1465 = vperm.xlu0 %1464, %v1243
      %v1466 = vpop.permute.xlu0 %1465
      %1469 = vset.pattern.permute.xlu0 0
      %1470 = vperm.xlu0 %1469, %v1244
      %v1471 = vpop.permute.xlu0 %1470
      %1474 = vset.pattern.permute.xlu0 0
      %1475 = vperm.xlu0 %1474, %v1245
      %v1476 = vpop.permute.xlu0 %1475
      %1479 = vset.pattern.permute.xlu0 0
      %1480 = vperm.xlu0 %1479, %v1246
      %v1481 = vpop.permute.xlu0 %1480
      %1484 = vset.pattern.permute.xlu0 0
      %1485 = vperm.xlu0 %1484, %v1247
      %v1486 = vpop.permute.xlu0 %1485
      %1489 = vset.pattern.permute.xlu0 0
      %1490 = vperm.xlu0 %1489, %v1248
      %v1491 = vpop.permute.xlu0 %1490
      %1494 = vset.pattern.permute.xlu0 0
      %1495 = vperm.xlu0 %1494, %v1249
      %v1496 = vpop.permute.xlu0 %1495
      %1499 = vset.pattern.permute.xlu0 0
      %1500 = vperm.xlu0 %1499, %v1250
      %v1501 = vpop.permute.xlu0 %1500
      %1504 = vset.pattern.permute.xlu0 0
      %1505 = vperm.xlu0 %1504, %v1251
      %v1506 = vpop.permute.xlu0 %1505
      %v1508 = vsub.f32 %v1028, %v1351
      %v1509 = vsub.f32 %v1029, %v1351
      %v1510 = vsub.f32 %v1030, %v1356
      %v1511 = vsub.f32 %v1031, %v1356
      %v1512 = vsub.f32 %v1032, %v1361
      %v1513 = vsub.f32 %v1033, %v1361
      %v1514 = vsub.f32 %v1034, %v1366
      %v1515 = vsub.f32 %v1035, %v1366
      %v1516 = vsub.f32 %v1036, %v1371
      %v1517 = vsub.f32 %v1037, %v1371
      %v1518 = vsub.f32 %v1038, %v1376
      %v1519 = vsub.f32 %v1039, %v1376
      %v1520 = vsub.f32 %v1040, %v1381
      %v1521 = vsub.f32 %v1041, %v1381
      %v1522 = vsub.f32 %v1042, %v1386
      %v1523 = vsub.f32 %v1043, %v1386
      %v1524 = vsub.f32 %v1044, %v1391
      %v1525 = vsub.f32 %v1045, %v1391
      %v1526 = vsub.f32 %v1046, %v1396
      %v1527 = vsub.f32 %v1047, %v1396
      %v1528 = vsub.f32 %v1048, %v1401
      %v1529 = vsub.f32 %v1049, %v1401
      %v1530 = vsub.f32 %v1050, %v1406
      %v1531 = vsub.f32 %v1051, %v1406
      %v1532 = vsub.f32 %v1052, %v1411
      %v1533 = vsub.f32 %v1053, %v1411
      %v1534 = vsub.f32 %v1054, %v1416
      %v1535 = vsub.f32 %v1055, %v1416
      %v1536 = vsub.f32 %v1056, %v1421
      %v1537 = vsub.f32 %v1057, %v1421
      %v1538 = vsub.f32 %v1058, %v1426
      %v1539 = vsub.f32 %v1059, %v1426
      %v1540 = vsub.f32 %v1060, %v1431
      %v1541 = vsub.f32 %v1061, %v1431
      %v1542 = vsub.f32 %v1062, %v1436
      %v1543 = vsub.f32 %v1063, %v1436
      %v1544 = vsub.f32 %v1064, %v1441
      %v1545 = vsub.f32 %v1065, %v1441
      %v1546 = vsub.f32 %v1066, %v1446
      %v1547 = vsub.f32 %v1067, %v1446
      %v1548 = vsub.f32 %v1068, %v1451
      %v1549 = vsub.f32 %v1069, %v1451
      %v1550 = vsub.f32 %v1070, %v1456
      %v1551 = vsub.f32 %v1071, %v1456
      %v1552 = vsub.f32 %v1072, %v1461
      %v1553 = vsub.f32 %v1073, %v1461
      %v1554 = vsub.f32 %v1074, %v1466
      %v1555 = vsub.f32 %v1075, %v1466
      %v1556 = vsub.f32 %v1076, %v1471
      %v1557 = vsub.f32 %v1077, %v1471
      %v1558 = vsub.f32 %v1078, %v1476
      %v1559 = vsub.f32 %v1079, %v1476
      %v1560 = vsub.f32 %v1080, %v1481
      %v1561 = vsub.f32 %v1081, %v1481
      %v1562 = vsub.f32 %v1082, %v1486
      %v1563 = vsub.f32 %v1083, %v1486
      %v1564 = vsub.f32 %v1084, %v1491
      %v1565 = vsub.f32 %v1085, %v1491
      %v1566 = vsub.f32 %v1086, %v1496
      %v1567 = vsub.f32 %v1087, %v1496
      %v1568 = vsub.f32 %v1088, %v1501
      %v1569 = vsub.f32 %v1089, %v1501
      %v1570 = vsub.f32 %v1090, %v1506
      %v1571 = vsub.f32 %v1091, %v1506
      %v1572 = vpack.c.bf16 %v1510, %v1508
      %v1573 = vpack.c.bf16 %v1511, %v1509
      %v1574 = vpack.c.bf16 %v1514, %v1512
      %v1575 = vpack.c.bf16 %v1515, %v1513
      %v1576 = vpack.c.bf16 %v1518, %v1516
      %v1577 = vpack.c.bf16 %v1519, %v1517
      %v1578 = vpack.c.bf16 %v1522, %v1520
      %v1579 = vpack.c.bf16 %v1523, %v1521
      %v1580 = vpack.c.bf16 %v1526, %v1524
      %v1581 = vpack.c.bf16 %v1527, %v1525
      %v1582 = vpack.c.bf16 %v1530, %v1528
      %v1583 = vpack.c.bf16 %v1531, %v1529
      %v1584 = vpack.c.bf16 %v1534, %v1532
      %v1585 = vpack.c.bf16 %v1535, %v1533
      %v1586 = vpack.c.bf16 %v1538, %v1536
      %v1587 = vpack.c.bf16 %v1539, %v1537
      %v1588 = vpack.c.bf16 %v1542, %v1540
      %v1589 = vpack.c.bf16 %v1543, %v1541
      %v1590 = vpack.c.bf16 %v1546, %v1544
      %v1591 = vpack.c.bf16 %v1547, %v1545
      %v1592 = vpack.c.bf16 %v1550, %v1548
      %v1593 = vpack.c.bf16 %v1551, %v1549
      %v1594 = vpack.c.bf16 %v1554, %v1552
      %v1595 = vpack.c.bf16 %v1555, %v1553
      %v1596 = vpack.c.bf16 %v1558, %v1556
      %v1597 = vpack.c.bf16 %v1559, %v1557
      %v1598 = vpack.c.bf16 %v1562, %v1560
      %v1599 = vpack.c.bf16 %v1563, %v1561
      %v1600 = vpack.c.bf16 %v1566, %v1564
      %v1601 = vpack.c.bf16 %v1567, %v1565
      %v1602 = vpack.c.bf16 %v1570, %v1568
      %v1603 = vpack.c.bf16 %v1571, %v1569
      %v1605 = vmul.bf16 %v1572, 1069105081
      %v1606 = vpow.bf16.pop %v1605
      %v1608 = vmul.bf16 %v1573, 1069105081
      %v1609 = vpow.bf16.pop %v1608
      %v1611 = vmul.bf16 %v1574, 1069105081
      %v1612 = vpow.bf16.pop %v1611
      %v1614 = vmul.bf16 %v1575, 1069105081
      %v1615 = vpow.bf16.pop %v1614
      %v1617 = vmul.bf16 %v1576, 1069105081
      %v1618 = vpow.bf16.pop %v1617
      %v1620 = vmul.bf16 %v1577, 1069105081
      %v1621 = vpow.bf16.pop %v1620
      %v1623 = vmul.bf16 %v1578, 1069105081
      %v1624 = vpow.bf16.pop %v1623
      %v1626 = vmul.bf16 %v1579, 1069105081
      %v1627 = vpow.bf16.pop %v1626
      %v1629 = vmul.bf16 %v1580, 1069105081
      %v1630 = vpow.bf16.pop %v1629
      %v1632 = vmul.bf16 %v1581, 1069105081
      %v1633 = vpow.bf16.pop %v1632
      %v1635 = vmul.bf16 %v1582, 1069105081
      %v1636 = vpow.bf16.pop %v1635
      %v1638 = vmul.bf16 %v1583, 1069105081
      %v1639 = vpow.bf16.pop %v1638
      %v1641 = vmul.bf16 %v1584, 1069105081
      %v1642 = vpow.bf16.pop %v1641
      %v1644 = vmul.bf16 %v1585, 1069105081
      %v1645 = vpow.bf16.pop %v1644
      %v1647 = vmul.bf16 %v1586, 1069105081
      %v1648 = vpow.bf16.pop %v1647
      %v1650 = vmul.bf16 %v1587, 1069105081
      %v1651 = vpow.bf16.pop %v1650
      %v1653 = vmul.bf16 %v1588, 1069105081
      %v1654 = vpow.bf16.pop %v1653
      %v1656 = vmul.bf16 %v1589, 1069105081
      %v1657 = vpow.bf16.pop %v1656
      %v1659 = vmul.bf16 %v1590, 1069105081
      %v1660 = vpow.bf16.pop %v1659
      %v1662 = vmul.bf16 %v1591, 1069105081
      %v1663 = vpow.bf16.pop %v1662
      %v1665 = vmul.bf16 %v1592, 1069105081
      %v1666 = vpow.bf16.pop %v1665
      %v1668 = vmul.bf16 %v1593, 1069105081
      %v1669 = vpow.bf16.pop %v1668
      %v1671 = vmul.bf16 %v1594, 1069105081
      %v1672 = vpow.bf16.pop %v1671
      %v1674 = vmul.bf16 %v1595, 1069105081
      %v1675 = vpow.bf16.pop %v1674
      %v1677 = vmul.bf16 %v1596, 1069105081
      %v1678 = vpow.bf16.pop %v1677
      %v1680 = vmul.bf16 %v1597, 1069105081
      %v1681 = vpow.bf16.pop %v1680
      %v1683 = vmul.bf16 %v1598, 1069105081
      %v1684 = vpow.bf16.pop %v1683
      %v1686 = vmul.bf16 %v1599, 1069105081
      %v1687 = vpow.bf16.pop %v1686
      %v1689 = vmul.bf16 %v1600, 1069105081
      %v1690 = vpow.bf16.pop %v1689
      %v1692 = vmul.bf16 %v1601, 1069105081
      %v1693 = vpow.bf16.pop %v1692
      %v1695 = vmul.bf16 %v1602, 1069105081
      %v1696 = vpow.bf16.pop %v1695
      %v1698 = vmul.bf16 %v1603, 1069105081
      %v1699 = vpow.bf16.pop %v1698
      %v1700 = vld [vmem:[#allocation3] sm:$0xff]
      %v1701 = vld [vmem:[#allocation3 + $0x8] sm:$0xff]
      %v1702 = vld [vmem:[#allocation3 + $0x10] sm:$0xff]
      %v1703 = vld [vmem:[#allocation3 + $0x18] sm:$0xff]
      %v1704 = vld [vmem:[#allocation3 + $0x20] sm:$0xff]
      %v1705 = vld [vmem:[#allocation3 + $0x28] sm:$0xff]
      %v1706 = vld [vmem:[#allocation3 + $0x30] sm:$0xff]
      %v1707 = vld [vmem:[#allocation3 + $0x38] sm:$0xff]
      %v1708 = vld [vmem:[#allocation3 + $0x40] sm:$0xff]
      %v1709 = vld [vmem:[#allocation3 + $0x48] sm:$0xff]
      %v1710 = vld [vmem:[#allocation3 + $0x50] sm:$0xff]
      %v1711 = vld [vmem:[#allocation3 + $0x58] sm:$0xff]
      %v1712 = vld [vmem:[#allocation3 + $0x60] sm:$0xff]
      %v1713 = vld [vmem:[#allocation3 + $0x68] sm:$0xff]
      %v1714 = vld [vmem:[#allocation3 + $0x70] sm:$0xff]
      %v1715 = vld [vmem:[#allocation3 + $0x78] sm:$0xff]
      %v1716 = vld [vmem:[#allocation3 + $0x80] sm:$0xff]
      %v1717 = vld [vmem:[#allocation3 + $0x88] sm:$0xff]
      %v1718 = vld [vmem:[#allocation3 + $0x90] sm:$0xff]
      %v1719 = vld [vmem:[#allocation3 + $0x98] sm:$0xff]
      %v1720 = vld [vmem:[#allocation3 + $0xa0] sm:$0xff]
      %v1721 = vld [vmem:[#allocation3 + $0xa8] sm:$0xff]
      %v1722 = vld [vmem:[#allocation3 + $0xb0] sm:$0xff]
      %v1723 = vld [vmem:[#allocation3 + $0xb8] sm:$0xff]
      %v1724 = vld [vmem:[#allocation3 + $0xc0] sm:$0xff]
      %v1725 = vld [vmem:[#allocation3 + $0xc8] sm:$0xff]
      %v1726 = vld [vmem:[#allocation3 + $0xd0] sm:$0xff]
      %v1727 = vld [vmem:[#allocation3 + $0xd8] sm:$0xff]
      %v1728 = vld [vmem:[#allocation3 + $0xe0] sm:$0xff]
      %v1729 = vld [vmem:[#allocation3 + $0xe8] sm:$0xff]
      %v1730 = vld [vmem:[#allocation3 + $0xf0] sm:$0xff]
      %v1731 = vld [vmem:[#allocation3 + $0xf8] sm:$0xff]
      %v1732 = vmul.f32 %v1285, %v1700
      %v1733 = vmul.f32 %v1287, %v1701
      %v1734 = vmul.f32 %v1289, %v1702
      %v1735 = vmul.f32 %v1291, %v1703
      %v1736 = vmul.f32 %v1293, %v1704
      %v1737 = vmul.f32 %v1295, %v1705
      %v1738 = vmul.f32 %v1297, %v1706
      %v1739 = vmul.f32 %v1299, %v1707
      %v1740 = vmul.f32 %v1301, %v1708
      %v1741 = vmul.f32 %v1303, %v1709
      %v1742 = vmul.f32 %v1305, %v1710
      %v1743 = vmul.f32 %v1307, %v1711
      %v1744 = vmul.f32 %v1309, %v1712
      %v1745 = vmul.f32 %v1311, %v1713
      %v1746 = vmul.f32 %v1313, %v1714
      %v1747 = vmul.f32 %v1315, %v1715
      %v1748 = vmul.f32 %v1317, %v1716
      %v1749 = vmul.f32 %v1319, %v1717
      %v1750 = vmul.f32 %v1321, %v1718
      %v1751 = vmul.f32 %v1323, %v1719
      %v1752 = vmul.f32 %v1325, %v1720
      %v1753 = vmul.f32 %v1327, %v1721
      %v1754 = vmul.f32 %v1329, %v1722
      %v1755 = vmul.f32 %v1331, %v1723
      %v1756 = vmul.f32 %v1333, %v1724
      %v1757 = vmul.f32 %v1335, %v1725
      %v1758 = vmul.f32 %v1337, %v1726
      %v1759 = vmul.f32 %v1339, %v1727
      %v1760 = vmul.f32 %v1341, %v1728
      %v1761 = vmul.f32 %v1343, %v1729
      %v1762 = vmul.f32 %v1345, %v1730
      %v1763 = vmul.f32 %v1347, %v1731
      %v1764 = vunpack.c.l.bf16 %v1606
      %v1765 = vunpack.c.l.bf16 %v1609
      %v1766 = vunpack.c.h.bf16 %v1606
      %v1767 = vunpack.c.h.bf16 %v1609
      %v1768 = vunpack.c.l.bf16 %v1612
      %v1769 = vunpack.c.l.bf16 %v1615
      %v1770 = vunpack.c.h.bf16 %v1612
      %v1771 = vunpack.c.h.bf16 %v1615
      %v1772 = vunpack.c.l.bf16 %v1618
      %v1773 = vunpack.c.l.bf16 %v1621
      %v1774 = vunpack.c.h.bf16 %v1618
      %v1775 = vunpack.c.h.bf16 %v1621
      %v1776 = vunpack.c.l.bf16 %v1624
      %v1777 = vunpack.c.l.bf16 %v1627
      %v1778 = vunpack.c.h.bf16 %v1624
      %v1779 = vunpack.c.h.bf16 %v1627
      %v1780 = vunpack.c.l.bf16 %v1630
      %v1781 = vunpack.c.l.bf16 %v1633
      %v1782 = vunpack.c.h.bf16 %v1630
      %v1783 = vunpack.c.h.bf16 %v1633
      %v1784 = vunpack.c.l.bf16 %v1636
      %v1785 = vunpack.c.l.bf16 %v1639
      %v1786 = vunpack.c.h.bf16 %v1636
      %v1787 = vunpack.c.h.bf16 %v1639
      %v1788 = vunpack.c.l.bf16 %v1642
      %v1789 = vunpack.c.l.bf16 %v1645
      %v1790 = vunpack.c.h.bf16 %v1642
      %v1791 = vunpack.c.h.bf16 %v1645
      %v1792 = vunpack.c.l.bf16 %v1648
      %v1793 = vunpack.c.l.bf16 %v1651
      %v1794 = vunpack.c.h.bf16 %v1648
      %v1795 = vunpack.c.h.bf16 %v1651
      %v1796 = vunpack.c.l.bf16 %v1654
      %v1797 = vunpack.c.l.bf16 %v1657
      %v1798 = vunpack.c.h.bf16 %v1654
      %v1799 = vunpack.c.h.bf16 %v1657
      %v1800 = vunpack.c.l.bf16 %v1660
      %v1801 = vunpack.c.l.bf16 %v1663
      %v1802 = vunpack.c.h.bf16 %v1660
      %v1803 = vunpack.c.h.bf16 %v1663
      %v1804 = vunpack.c.l.bf16 %v1666
      %v1805 = vunpack.c.l.bf16 %v1669
      %v1806 = vunpack.c.h.bf16 %v1666
      %v1807 = vunpack.c.h.bf16 %v1669
      %v1808 = vunpack.c.l.bf16 %v1672
      %v1809 = vunpack.c.l.bf16 %v1675
      %v1810 = vunpack.c.h.bf16 %v1672
      %v1811 = vunpack.c.h.bf16 %v1675
      %v1812 = vunpack.c.l.bf16 %v1678
      %v1813 = vunpack.c.l.bf16 %v1681
      %v1814 = vunpack.c.h.bf16 %v1678
      %v1815 = vunpack.c.h.bf16 %v1681
      %v1816 = vunpack.c.l.bf16 %v1684
      %v1817 = vunpack.c.l.bf16 %v1687
      %v1818 = vunpack.c.h.bf16 %v1684
      %v1819 = vunpack.c.h.bf16 %v1687
      %v1820 = vunpack.c.l.bf16 %v1690
      %v1821 = vunpack.c.l.bf16 %v1693
      %v1822 = vunpack.c.h.bf16 %v1690
      %v1823 = vunpack.c.h.bf16 %v1693
      %v1824 = vunpack.c.l.bf16 %v1696
      %v1825 = vunpack.c.l.bf16 %v1699
      %v1826 = vunpack.c.h.bf16 %v1696
      %v1827 = vunpack.c.h.bf16 %v1699
      %v1828 = vadd.f32 %v1764, %v1765
      %1829 = vadd.xlane.f32.xlu0 %v1828
      %v1830 = vpop.xlane.xlu0 %1829
      %v1831 = vadd.f32 %v1766, %v1767
      %1832 = vadd.xlane.f32.xlu0 %v1831
      %v1833 = vpop.xlane.xlu0 %1832
      %v1834 = vadd.f32 %v1768, %v1769
      %1835 = vadd.xlane.f32.xlu0 %v1834
      %v1836 = vpop.xlane.xlu0 %1835
      %v1837 = vadd.f32 %v1770, %v1771
      %1838 = vadd.xlane.f32.xlu0 %v1837
      %v1839 = vpop.xlane.xlu0 %1838
      %v1840 = vadd.f32 %v1772, %v1773
      %1841 = vadd.xlane.f32.xlu0 %v1840
      %v1842 = vpop.xlane.xlu0 %1841
      %v1843 = vadd.f32 %v1774, %v1775
      %1844 = vadd.xlane.f32.xlu0 %v1843
      %v1845 = vpop.xlane.xlu0 %1844
      %v1846 = vadd.f32 %v1776, %v1777
      %1847 = vadd.xlane.f32.xlu0 %v1846
      %v1848 = vpop.xlane.xlu0 %1847
      %v1849 = vadd.f32 %v1778, %v1779
      %1850 = vadd.xlane.f32.xlu0 %v1849
      %v1851 = vpop.xlane.xlu0 %1850
      %v1852 = vadd.f32 %v1780, %v1781
      %1853 = vadd.xlane.f32.xlu0 %v1852
      %v1854 = vpop.xlane.xlu0 %1853
      %v1855 = vadd.f32 %v1782, %v1783
      %1856 = vadd.xlane.f32.xlu0 %v1855
      %v1857 = vpop.xlane.xlu0 %1856
      %v1858 = vadd.f32 %v1784, %v1785
      %1859 = vadd.xlane.f32.xlu0 %v1858
      %v1860 = vpop.xlane.xlu0 %1859
      %v1861 = vadd.f32 %v1786, %v1787
      %1862 = vadd.xlane.f32.xlu0 %v1861
      %v1863 = vpop.xlane.xlu0 %1862
      %v1864 = vadd.f32 %v1788, %v1789
      %1865 = vadd.xlane.f32.xlu0 %v1864
      %v1866 = vpop.xlane.xlu0 %1865
      %v1867 = vadd.f32 %v1790, %v1791
      %1868 = vadd.xlane.f32.xlu0 %v1867
      %v1869 = vpop.xlane.xlu0 %1868
      %v1870 = vadd.f32 %v1792, %v1793
      %1871 = vadd.xlane.f32.xlu0 %v1870
      %v1872 = vpop.xlane.xlu0 %1871
      %v1873 = vadd.f32 %v1794, %v1795
      %1874 = vadd.xlane.f32.xlu0 %v1873
      %v1875 = vpop.xlane.xlu0 %1874
      %v1876 = vadd.f32 %v1796, %v1797
      %1877 = vadd.xlane.f32.xlu0 %v1876
      %v1878 = vpop.xlane.xlu0 %1877
      %v1879 = vadd.f32 %v1798, %v1799
      %1880 = vadd.xlane.f32.xlu0 %v1879
      %v1881 = vpop.xlane.xlu0 %1880
      %v1882 = vadd.f32 %v1800, %v1801
      %1883 = vadd.xlane.f32.xlu0 %v1882
      %v1884 = vpop.xlane.xlu0 %1883
      %v1885 = vadd.f32 %v1802, %v1803
      %1886 = vadd.xlane.f32.xlu0 %v1885
      %v1887 = vpop.xlane.xlu0 %1886
      %v1888 = vadd.f32 %v1804, %v1805
      %1889 = vadd.xlane.f32.xlu0 %v1888
      %v1890 = vpop.xlane.xlu0 %1889
      %v1891 = vadd.f32 %v1806, %v1807
      %1892 = vadd.xlane.f32.xlu0 %v1891
      %v1893 = vpop.xlane.xlu0 %1892
      %v1894 = vadd.f32 %v1808, %v1809
      %1895 = vadd.xlane.f32.xlu0 %v1894
      %v1896 = vpop.xlane.xlu0 %1895
      %v1897 = vadd.f32 %v1810, %v1811
      %1898 = vadd.xlane.f32.xlu0 %v1897
      %v1899 = vpop.xlane.xlu0 %1898
      %v1900 = vadd.f32 %v1812, %v1813
      %1901 = vadd.xlane.f32.xlu0 %v1900
      %v1902 = vpop.xlane.xlu0 %1901
      %v1903 = vadd.f32 %v1814, %v1815
      %1904 = vadd.xlane.f32.xlu0 %v1903
      %v1905 = vpop.xlane.xlu0 %1904
      %v1906 = vadd.f32 %v1816, %v1817
      %1907 = vadd.xlane.f32.xlu0 %v1906
      %v1908 = vpop.xlane.xlu0 %1907
      %v1909 = vadd.f32 %v1818, %v1819
      %1910 = vadd.xlane.f32.xlu0 %v1909
      %v1911 = vpop.xlane.xlu0 %1910
      %v1912 = vadd.f32 %v1820, %v1821
      %1913 = vadd.xlane.f32.xlu0 %v1912
      %v1914 = vpop.xlane.xlu0 %1913
      %v1915 = vadd.f32 %v1822, %v1823
      %1916 = vadd.xlane.f32.xlu0 %v1915
      %v1917 = vpop.xlane.xlu0 %1916
      %v1918 = vadd.f32 %v1824, %v1825
      %1919 = vadd.xlane.f32.xlu0 %v1918
      %v1920 = vpop.xlane.xlu0 %1919
      %v1921 = vadd.f32 %v1826, %v1827
      %1922 = vadd.xlane.f32.xlu0 %v1921
      %v1923 = vpop.xlane.xlu0 %1922
      %v1924 = vadd.f32 %v1732, %v1830
      %v1925 = vadd.f32 %v1733, %v1833
      %v1926 = vadd.f32 %v1734, %v1836
      %v1927 = vadd.f32 %v1735, %v1839
      %v1928 = vadd.f32 %v1736, %v1842
      %v1929 = vadd.f32 %v1737, %v1845
      %v1930 = vadd.f32 %v1738, %v1848
      %v1931 = vadd.f32 %v1739, %v1851
      %v1932 = vadd.f32 %v1740, %v1854
      %v1933 = vadd.f32 %v1741, %v1857
      %v1934 = vadd.f32 %v1742, %v1860
      %v1935 = vadd.f32 %v1743, %v1863
      %v1936 = vadd.f32 %v1744, %v1866
      %v1937 = vadd.f32 %v1745, %v1869
      %v1938 = vadd.f32 %v1746, %v1872
      %v1939 = vadd.f32 %v1747, %v1875
      %v1940 = vadd.f32 %v1748, %v1878
      %v1941 = vadd.f32 %v1749, %v1881
      %v1942 = vadd.f32 %v1750, %v1884
      %v1943 = vadd.f32 %v1751, %v1887
      %v1944 = vadd.f32 %v1752, %v1890
      %v1945 = vadd.f32 %v1753, %v1893
      %v1946 = vadd.f32 %v1754, %v1896
      %v1947 = vadd.f32 %v1755, %v1899
      %v1948 = vadd.f32 %v1756, %v1902
      %v1949 = vadd.f32 %v1757, %v1905
      %v1950 = vadd.f32 %v1758, %v1908
      %v1951 = vadd.f32 %v1759, %v1911
      %v1952 = vadd.f32 %v1760, %v1914
      %v1953 = vadd.f32 %v1761, %v1917
      %v1954 = vadd.f32 %v1762, %v1920
      %v1955 = vadd.f32 %v1763, %v1923
      %vm1956 = vcmask 7168
      %1957 = vst.msk [vmem:[#allocation3] sm:$0xff] %vm1956, %v1924
      %1958 = vst.msk [vmem:[#allocation3 + $0x8] sm:$0xff] %vm1956, %v1925
      %1959 = vst.msk [vmem:[#allocation3 + $0x10] sm:$0xff] %vm1956, %v1926
      %1960 = vst.msk [vmem:[#allocation3 + $0x18] sm:$0xff] %vm1956, %v1927
      %1961 = vst.msk [vmem:[#allocation3 + $0x20] sm:$0xff] %vm1956, %v1928
      %1962 = vst.msk [vmem:[#allocation3 + $0x28] sm:$0xff] %vm1956, %v1929
      %1963 = vst.msk [vmem:[#allocation3 + $0x30] sm:$0xff] %vm1956, %v1930
      %1964 = vst.msk [vmem:[#allocation3 + $0x38] sm:$0xff] %vm1956, %v1931
      %1965 = vst.msk [vmem:[#allocation3 + $0x40] sm:$0xff] %vm1956, %v1932
      %1966 = vst.msk [vmem:[#allocation3 + $0x48] sm:$0xff] %vm1956, %v1933
      %1967 = vst.msk [vmem:[#allocation3 + $0x50] sm:$0xff] %vm1956, %v1934
      %1968 = vst.msk [vmem:[#allocation3 + $0x58] sm:$0xff] %vm1956, %v1935
      %1969 = vst.msk [vmem:[#allocation3 + $0x60] sm:$0xff] %vm1956, %v1936
      %1970 = vst.msk [vmem:[#allocation3 + $0x68] sm:$0xff] %vm1956, %v1937
      %1971 = vst.msk [vmem:[#allocation3 + $0x70] sm:$0xff] %vm1956, %v1938
      %1972 = vst.msk [vmem:[#allocation3 + $0x78] sm:$0xff] %vm1956, %v1939
      %1973 = vst.msk [vmem:[#allocation3 + $0x80] sm:$0xff] %vm1956, %v1940
      %1974 = vst.msk [vmem:[#allocation3 + $0x88] sm:$0xff] %vm1956, %v1941
      %1975 = vst.msk [vmem:[#allocation3 + $0x90] sm:$0xff] %vm1956, %v1942
      %1976 = vst.msk [vmem:[#allocation3 + $0x98] sm:$0xff] %vm1956, %v1943
      %1977 = vst.msk [vmem:[#allocation3 + $0xa0] sm:$0xff] %vm1956, %v1944
      %1978 = vst.msk [vmem:[#allocation3 + $0xa8] sm:$0xff] %vm1956, %v1945
      %1979 = vst.msk [vmem:[#allocation3 + $0xb0] sm:$0xff] %vm1956, %v1946
      %1980 = vst.msk [vmem:[#allocation3 + $0xb8] sm:$0xff] %vm1956, %v1947
      %1981 = vst.msk [vmem:[#allocation3 + $0xc0] sm:$0xff] %vm1956, %v1948
      %1982 = vst.msk [vmem:[#allocation3 + $0xc8] sm:$0xff] %vm1956, %v1949
      %1983 = vst.msk [vmem:[#allocation3 + $0xd0] sm:$0xff] %vm1956, %v1950
      %1984 = vst.msk [vmem:[#allocation3 + $0xd8] sm:$0xff] %vm1956, %v1951
      %1985 = vst.msk [vmem:[#allocation3 + $0xe0] sm:$0xff] %vm1956, %v1952
      %1986 = vst.msk [vmem:[#allocation3 + $0xe8] sm:$0xff] %vm1956, %v1953
      %1987 = vst.msk [vmem:[#allocation3 + $0xf0] sm:$0xff] %vm1956, %v1954
      %1988 = vst.msk [vmem:[#allocation3 + $0xf8] sm:$0xff] %vm1956, %v1955
      %v1989 = vld [vmem:[#allocation4] sm:$0xff]
      %v1990 = vld [vmem:[#allocation4 + $0x8] sm:$0xff]
      %v1991 = vld [vmem:[#allocation4 + $0x10] sm:$0xff]
      %v1992 = vld [vmem:[#allocation4 + $0x18] sm:$0xff]
      %v1993 = vld [vmem:[#allocation4 + $0x20] sm:$0xff]
      %v1994 = vld [vmem:[#allocation4 + $0x28] sm:$0xff]
      %v1995 = vld [vmem:[#allocation4 + $0x30] sm:$0xff]
      %v1996 = vld [vmem:[#allocation4 + $0x38] sm:$0xff]
      %v1997 = vld [vmem:[#allocation4 + $0x40] sm:$0xff]
      %v1998 = vld [vmem:[#allocation4 + $0x48] sm:$0xff]
      %v1999 = vld [vmem:[#allocation4 + $0x50] sm:$0xff]
      %v2000 = vld [vmem:[#allocation4 + $0x58] sm:$0xff]
      %v2001 = vld [vmem:[#allocation4 + $0x60] sm:$0xff]
      %v2002 = vld [vmem:[#allocation4 + $0x68] sm:$0xff]
      %v2003 = vld [vmem:[#allocation4 + $0x70] sm:$0xff]
      %v2004 = vld [vmem:[#allocation4 + $0x78] sm:$0xff]
      %v2005 = vld [vmem:[#allocation4 + $0x80] sm:$0xff]
      %v2006 = vld [vmem:[#allocation4 + $0x88] sm:$0xff]
      %v2007 = vld [vmem:[#allocation4 + $0x90] sm:$0xff]
      %v2008 = vld [vmem:[#allocation4 + $0x98] sm:$0xff]
      %v2009 = vld [vmem:[#allocation4 + $0xa0] sm:$0xff]
      %v2010 = vld [vmem:[#allocation4 + $0xa8] sm:$0xff]
      %v2011 = vld [vmem:[#allocation4 + $0xb0] sm:$0xff]
      %v2012 = vld [vmem:[#allocation4 + $0xb8] sm:$0xff]
      %v2013 = vld [vmem:[#allocation4 + $0xc0] sm:$0xff]
      %v2014 = vld [vmem:[#allocation4 + $0xc8] sm:$0xff]
      %v2015 = vld [vmem:[#allocation4 + $0xd0] sm:$0xff]
      %v2016 = vld [vmem:[#allocation4 + $0xd8] sm:$0xff]
      %v2017 = vld [vmem:[#allocation4 + $0xe0] sm:$0xff]
      %v2018 = vld [vmem:[#allocation4 + $0xe8] sm:$0xff]
      %v2019 = vld [vmem:[#allocation4 + $0xf0] sm:$0xff]
      %v2020 = vld [vmem:[#allocation4 + $0xf8] sm:$0xff]
      %2022 = vset.pattern.permute.xlu0 0
      %2023 = vperm.xlu0 %2022, %v1285
      %v2024 = vpop.permute.xlu0 %2023
      %2027 = vset.pattern.permute.xlu0 0
      %2028 = vperm.xlu0 %2027, %v1287
      %v2029 = vpop.permute.xlu0 %2028
      %2032 = vset.pattern.permute.xlu0 0
      %2033 = vperm.xlu0 %2032, %v1289
      %v2034 = vpop.permute.xlu0 %2033
      %2037 = vset.pattern.permute.xlu0 0
      %2038 = vperm.xlu0 %2037, %v1291
      %v2039 = vpop.permute.xlu0 %2038
      %2042 = vset.pattern.permute.xlu0 0
      %2043 = vperm.xlu0 %2042, %v1293
      %v2044 = vpop.permute.xlu0 %2043
      %2047 = vset.pattern.permute.xlu0 0
      %2048 = vperm.xlu0 %2047, %v1295
      %v2049 = vpop.permute.xlu0 %2048
      %2052 = vset.pattern.permute.xlu0 0
      %2053 = vperm.xlu0 %2052, %v1297
      %v2054 = vpop.permute.xlu0 %2053
      %2057 = vset.pattern.permute.xlu0 0
      %2058 = vperm.xlu0 %2057, %v1299
      %v2059 = vpop.permute.xlu0 %2058
      %2062 = vset.pattern.permute.xlu0 0
      %2063 = vperm.xlu0 %2062, %v1301
      %v2064 = vpop.permute.xlu0 %2063
      %2067 = vset.pattern.permute.xlu0 0
      %2068 = vperm.xlu0 %2067, %v1303
      %v2069 = vpop.permute.xlu0 %2068
      %2072 = vset.pattern.permute.xlu0 0
      %2073 = vperm.xlu0 %2072, %v1305
      %v2074 = vpop.permute.xlu0 %2073
      %2077 = vset.pattern.permute.xlu0 0
      %2078 = vperm.xlu0 %2077, %v1307
      %v2079 = vpop.permute.xlu0 %2078
      %2082 = vset.pattern.permute.xlu0 0
      %2083 = vperm.xlu0 %2082, %v1309
      %v2084 = vpop.permute.xlu0 %2083
      %2087 = vset.pattern.permute.xlu0 0
      %2088 = vperm.xlu0 %2087, %v1311
      %v2089 = vpop.permute.xlu0 %2088
      %2092 = vset.pattern.permute.xlu0 0
      %2093 = vperm.xlu0 %2092, %v1313
      %v2094 = vpop.permute.xlu0 %2093
      %2097 = vset.pattern.permute.xlu0 0
      %2098 = vperm.xlu0 %2097, %v1315
      %v2099 = vpop.permute.xlu0 %2098
      %2102 = vset.pattern.permute.xlu0 0
      %2103 = vperm.xlu0 %2102, %v1317
      %v2104 = vpop.permute.xlu0 %2103
      %2107 = vset.pattern.permute.xlu0 0
      %2108 = vperm.xlu0 %2107, %v1319
      %v2109 = vpop.permute.xlu0 %2108
      %2112 = vset.pattern.permute.xlu0 0
      %2113 = vperm.xlu0 %2112, %v1321
      %v2114 = vpop.permute.xlu0 %2113
      %2117 = vset.pattern.permute.xlu0 0
      %2118 = vperm.xlu0 %2117, %v1323
      %v2119 = vpop.permute.xlu0 %2118
      %2122 = vset.pattern.permute.xlu0 0
      %2123 = vperm.xlu0 %2122, %v1325
      %v2124 = vpop.permute.xlu0 %2123
      %2127 = vset.pattern.permute.xlu0 0
      %2128 = vperm.xlu0 %2127, %v1327
      %v2129 = vpop.permute.xlu0 %2128
      %2132 = vset.pattern.permute.xlu0 0
      %2133 = vperm.xlu0 %2132, %v1329
      %v2134 = vpop.permute.xlu0 %2133
      %2137 = vset.pattern.permute.xlu0 0
      %2138 = vperm.xlu0 %2137, %v1331
      %v2139 = vpop.permute.xlu0 %2138
      %2142 = vset.pattern.permute.xlu0 0
      %2143 = vperm.xlu0 %2142, %v1333
      %v2144 = vpop.permute.xlu0 %2143
      %2147 = vset.pattern.permute.xlu0 0
      %2148 = vperm.xlu0 %2147, %v1335
      %v2149 = vpop.permute.xlu0 %2148
      %2152 = vset.pattern.permute.xlu0 0
      %2153 = vperm.xlu0 %2152, %v1337
      %v2154 = vpop.permute.xlu0 %2153
      %2157 = vset.pattern.permute.xlu0 0
      %2158 = vperm.xlu0 %2157, %v1339
      %v2159 = vpop.permute.xlu0 %2158
      %2162 = vset.pattern.permute.xlu0 0
      %2163 = vperm.xlu0 %2162, %v1341
      %v2164 = vpop.permute.xlu0 %2163
      %2167 = vset.pattern.permute.xlu0 0
      %2168 = vperm.xlu0 %2167, %v1343
      %v2169 = vpop.permute.xlu0 %2168
      %2172 = vset.pattern.permute.xlu0 0
      %2173 = vperm.xlu0 %2172, %v1345
      %v2174 = vpop.permute.xlu0 %2173
      %2177 = vset.pattern.permute.xlu0 0
      %2178 = vperm.xlu0 %2177, %v1347
      %v2179 = vpop.permute.xlu0 %2178
      %v2181 = vmul.f32 %v2024, %v1989
      %v2182 = vmul.f32 %v2029, %v1990
      %v2183 = vmul.f32 %v2034, %v1991
      %v2184 = vmul.f32 %v2039, %v1992
      %v2185 = vmul.f32 %v2044, %v1993
      %v2186 = vmul.f32 %v2049, %v1994
      %v2187 = vmul.f32 %v2054, %v1995
      %v2188 = vmul.f32 %v2059, %v1996
      %v2189 = vmul.f32 %v2064, %v1997
      %v2190 = vmul.f32 %v2069, %v1998
      %v2191 = vmul.f32 %v2074, %v1999
      %v2192 = vmul.f32 %v2079, %v2000
      %v2193 = vmul.f32 %v2084, %v2001
      %v2194 = vmul.f32 %v2089, %v2002
      %v2195 = vmul.f32 %v2094, %v2003
      %v2196 = vmul.f32 %v2099, %v2004
      %v2197 = vmul.f32 %v2104, %v2005
      %v2198 = vmul.f32 %v2109, %v2006
      %v2199 = vmul.f32 %v2114, %v2007
      %v2200 = vmul.f32 %v2119, %v2008
      %v2201 = vmul.f32 %v2124, %v2009
      %v2202 = vmul.f32 %v2129, %v2010
      %v2203 = vmul.f32 %v2134, %v2011
      %v2204 = vmul.f32 %v2139, %v2012
      %v2205 = vmul.f32 %v2144, %v2013
      %v2206 = vmul.f32 %v2149, %v2014
      %v2207 = vmul.f32 %v2154, %v2015
      %v2208 = vmul.f32 %v2159, %v2016
      %v2209 = vmul.f32 %v2164, %v2017
      %v2210 = vmul.f32 %v2169, %v2018
      %v2211 = vmul.f32 %v2174, %v2019
      %v2212 = vmul.f32 %v2179, %v2020
      %v2213 = vld [vmem:[#allocation13] sm:$0xf]
      %v2214 = vld [vmem:[#allocation13 + $0x4] sm:$0xf]
      %v2215 = vld [vmem:[#allocation13 + $0x8] sm:$0xf]
      %v2216 = vld [vmem:[#allocation13 + $0xc] sm:$0xf]
      %v2217 = vld [vmem:[#allocation13 + $0x10] sm:$0xf]
      %v2218 = vld [vmem:[#allocation13 + $0x14] sm:$0xf]
      %v2219 = vld [vmem:[#allocation13 + $0x18] sm:$0xf]
      %v2220 = vld [vmem:[#allocation13 + $0x1c] sm:$0xf]
      %v2221 = vld [vmem:[#allocation13 + $0x20] sm:$0xf]
      %v2222 = vld [vmem:[#allocation13 + $0x24] sm:$0xf]
      %v2223 = vld [vmem:[#allocation13 + $0x28] sm:$0xf]
      %v2224 = vld [vmem:[#allocation13 + $0x2c] sm:$0xf]
      %v2225 = vld [vmem:[#allocation13 + $0x30] sm:$0xf]
      %v2226 = vld [vmem:[#allocation13 + $0x34] sm:$0xf]
      %v2227 = vld [vmem:[#allocation13 + $0x38] sm:$0xf]
      %v2228 = vld [vmem:[#allocation13 + $0x3c] sm:$0xf]
      %v2229 = vld [vmem:[#allocation13 + $0x40] sm:$0xf]
      %v2230 = vld [vmem:[#allocation13 + $0x44] sm:$0xf]
      %v2231 = vld [vmem:[#allocation13 + $0x48] sm:$0xf]
      %v2232 = vld [vmem:[#allocation13 + $0x4c] sm:$0xf]
      %v2233 = vld [vmem:[#allocation13 + $0x50] sm:$0xf]
      %v2234 = vld [vmem:[#allocation13 + $0x54] sm:$0xf]
      %v2235 = vld [vmem:[#allocation13 + $0x58] sm:$0xf]
      %v2236 = vld [vmem:[#allocation13 + $0x5c] sm:$0xf]
      %v2237 = vld [vmem:[#allocation13 + $0x60] sm:$0xf]
      %v2238 = vld [vmem:[#allocation13 + $0x64] sm:$0xf]
      %v2239 = vld [vmem:[#allocation13 + $0x68] sm:$0xf]
      %v2240 = vld [vmem:[#allocation13 + $0x6c] sm:$0xf]
      %v2241 = vld [vmem:[#allocation13 + $0x70] sm:$0xf]
      %v2242 = vld [vmem:[#allocation13 + $0x74] sm:$0xf]
      %v2243 = vld [vmem:[#allocation13 + $0x78] sm:$0xf]
      %v2244 = vld [vmem:[#allocation13 + $0x7c] sm:$0xf]
      %v2277 = vunpack.c.l.b16 %v2213
      %v2278 = vunpack.c.l.b16 %v2214
      %v2279 = vunpack.c.l.b16 %v2215
      %v2280 = vunpack.c.l.b16 %v2216
      %v2281 = vunpack.c.l.b16 %v2217
      %v2282 = vunpack.c.l.b16 %v2218
      %v2283 = vunpack.c.l.b16 %v2219
      %v2284 = vunpack.c.l.b16 %v2220
      %v2285 = vunpack.c.l.b16 %v2221
      %v2286 = vunpack.c.l.b16 %v2222
      %v2287 = vunpack.c.l.b16 %v2223
      %v2288 = vunpack.c.l.b16 %v2224
      %v2289 = vunpack.c.l.b16 %v2225
      %v2290 = vunpack.c.l.b16 %v2226
      %v2291 = vunpack.c.l.b16 %v2227
      %v2292 = vunpack.c.l.b16 %v2228
      %v2293 = vunpack.c.l.b16 %v2229
      %v2294 = vunpack.c.l.b16 %v2230
      %v2295 = vunpack.c.l.b16 %v2231
      %v2296 = vunpack.c.l.b16 %v2232
      %v2297 = vunpack.c.l.b16 %v2233
      %v2298 = vunpack.c.l.b16 %v2234
      %v2299 = vunpack.c.l.b16 %v2235
      %v2300 = vunpack.c.l.b16 %v2236
      %v2301 = vunpack.c.l.b16 %v2237
      %v2302 = vunpack.c.l.b16 %v2238
      %v2303 = vunpack.c.l.b16 %v2239
      %v2304 = vunpack.c.l.b16 %v2240
      %v2305 = vunpack.c.l.b16 %v2241
      %v2306 = vunpack.c.l.b16 %v2242
      %v2307 = vunpack.c.l.b16 %v2243
      %v2308 = vunpack.c.l.b16 %v2244
      %v2309 = vpack.c.b16 %v2278, %v2277
      %v2310 = vpack.c.b16 %v2280, %v2279
      %v2311 = vpack.c.b16 %v2282, %v2281
      %v2312 = vpack.c.b16 %v2284, %v2283
      %v2313 = vpack.c.b16 %v2286, %v2285
      %v2314 = vpack.c.b16 %v2288, %v2287
      %v2315 = vpack.c.b16 %v2290, %v2289
      %v2316 = vpack.c.b16 %v2292, %v2291
      %v2317 = vpack.c.b16 %v2294, %v2293
      %v2318 = vpack.c.b16 %v2296, %v2295
      %v2319 = vpack.c.b16 %v2298, %v2297
      %v2320 = vpack.c.b16 %v2300, %v2299
      %v2321 = vpack.c.b16 %v2302, %v2301
      %v2322 = vpack.c.b16 %v2304, %v2303
      %v2323 = vpack.c.b16 %v2306, %v2305
      %v2324 = vpack.c.b16 %v2308, %v2307
      %2341 = vmatprep.subr.bf16.mxu0 0
      %2342 = vmatpush1.bf16.msra.mxu0 %v2309
      %2343 = vmatprep.subr.bf16.mxu0 0
      %2344 = vmatpush1.bf16.msra.mxu0 %v2310
      %2345 = vmatprep.subr.bf16.mxu0 0
      %2346 = vmatpush1.bf16.msra.mxu0 %v2311
      %2347 = vmatprep.subr.bf16.mxu0 0
      %2348 = vmatpush1.bf16.msra.mxu0 %v2312
      %2349 = vmatprep.subr.bf16.mxu0 0
      %2350 = vmatpush1.bf16.msra.mxu0 %v2313
      %2351 = vmatprep.subr.bf16.mxu0 0
      %2352 = vmatpush1.bf16.msra.mxu0 %v2314
      %2353 = vmatprep.subr.bf16.mxu0 0
      %2354 = vmatpush1.bf16.msra.mxu0 %v2315
      %2355 = vmatprep.subr.bf16.mxu0 0
      %2356 = vmatpush1.bf16.msra.mxu0 %v2316
      %2357 = vmatprep.subr.bf16.mxu0 0
      %2358 = vmatpush1.bf16.msra.mxu0 %v2317
      %2359 = vmatprep.subr.bf16.mxu0 0
      %2360 = vmatpush1.bf16.msra.mxu0 %v2318
      %2361 = vmatprep.subr.bf16.mxu0 0
      %2362 = vmatpush1.bf16.msra.mxu0 %v2319
      %2363 = vmatprep.subr.bf16.mxu0 0
      %2364 = vmatpush1.bf16.msra.mxu0 %v2320
      %2365 = vmatprep.subr.bf16.mxu0 0
      %2366 = vmatpush1.bf16.msra.mxu0 %v2321
      %2367 = vmatprep.subr.bf16.mxu0 0
      %2368 = vmatpush1.bf16.msra.mxu0 %v2322
      %2369 = vmatprep.subr.bf16.mxu0 0
      %2370 = vmatpush1.bf16.msra.mxu0 %v2323
      %2371 = vmatprep.subr.bf16.mxu0 0
      %2372 = vmatpush1.bf16.msra.mxu0 %v2324
      %2373 = vmatprep.mubr.bf16.mxu0 %v1609
      %2374 = vmatmul.mubr.bf16.gmra.mrb[0].mxu0 %v1606
      %v2375 = vpop.f32.mrb[0].mxu0
      %v2376 = vadd.f32 0.0, %v2375
      %v2377 = vpop.f32.mrb[0].mxu0
      %v2378 = vpop.f32.mrb[0].mxu0
      %v2379 = vadd.f32 0.0, %v2378
      %v2380 = vpop.f32.mrb[0].mxu0
      %2381 = vmatprep.mubr.bf16.mxu0 %v1615
      %2382 = vmatmul.mubr.bf16.gmra.mrb[0].mxu0 %v1612
      %v2383 = vpop.f32.mrb[0].mxu0
      %v2384 = vadd.f32 0.0, %v2383
      %v2385 = vpop.f32.mrb[0].mxu0
      %v2386 = vpop.f32.mrb[0].mxu0
      %v2387 = vadd.f32 0.0, %v2386
      %v2388 = vpop.f32.mrb[0].mxu0
      %2389 = vmatprep.mubr.bf16.mxu0 %v1621
      %2390 = vmatmul.mubr.bf16.gmra.mrb[0].mxu0 %v1618
      %v2391 = vpop.f32.mrb[0].mxu0
      %v2392 = vadd.f32 0.0, %v2391
      %v2393 = vpop.f32.mrb[0].mxu0
      %v2394 = vpop.f32.mrb[0].mxu0
      %v2395 = vadd.f32 0.0, %v2394
      %v2396 = vpop.f32.mrb[0].mxu0
      %2397 = vmatprep.mubr.bf16.mxu0 %v1627
      %2398 = vmatmul.mubr.bf16.gmra.mrb[0].mxu0 %v1624
      %v2399 = vpop.f32.mrb[0].mxu0
      %v2400 = vadd.f32 0.0, %v2399
      %v2401 = vpop.f32.mrb[0].mxu0
      %v2402 = vpop.f32.mrb[0].mxu0
      %v2403 = vadd.f32 0.0, %v2402
      %v2404 = vpop.f32.mrb[0].mxu0
      %2405 = vmatprep.mubr.bf16.mxu0 %v1633
      %2406 = vmatmul.mubr.bf16.gmra.mrb[0].mxu0 %v1630
      %v2407 = vpop.f32.mrb[0].mxu0
      %v2408 = vadd.f32 0.0, %v2407
      %v2409 = vpop.f32.mrb[0].mxu0
      %v2410 = vpop.f32.mrb[0].mxu0
      %v2411 = vadd.f32 0.0, %v2410
      %v2412 = vpop.f32.mrb[0].mxu0
      %2413 = vmatprep.mubr.bf16.mxu0 %v1639
      %2414 = vmatmul.mubr.bf16.gmra.mrb[0].mxu0 %v1636
      %v2415 = vpop.f32.mrb[0].mxu0
      %v2416 = vadd.f32 0.0, %v2415
      %v2417 = vpop.f32.mrb[0].mxu0
      %v2418 = vpop.f32.mrb[0].mxu0
      %v2419 = vadd.f32 0.0, %v2418
      %v2420 = vpop.f32.mrb[0].mxu0
      %2421 = vmatprep.mubr.bf16.mxu0 %v1645
      %2422 = vmatmul.mubr.bf16.gmra.mrb[0].mxu0 %v1642
      %v2423 = vpop.f32.mrb[0].mxu0
      %v2424 = vadd.f32 0.0, %v2423
      %v2425 = vpop.f32.mrb[0].mxu0
      %v2426 = vpop.f32.mrb[0].mxu0
      %v2427 = vadd.f32 0.0, %v2426
      %v2428 = vpop.f32.mrb[0].mxu0
      %2429 = vmatprep.mubr.bf16.mxu0 %v1651
      %2430 = vmatmul.mubr.bf16.gmra.mrb[0].mxu0 %v1648
      %v2431 = vpop.f32.mrb[0].mxu0
      %v2432 = vadd.f32 0.0, %v2431
      %v2433 = vpop.f32.mrb[0].mxu0
      %v2434 = vpop.f32.mrb[0].mxu0
      %v2435 = vadd.f32 0.0, %v2434
      %v2436 = vpop.f32.mrb[0].mxu0
      %2437 = vmatprep.mubr.bf16.mxu0 %v1657
      %2438 = vmatmul.mubr.bf16.gmra.mrb[0].mxu0 %v1654
      %v2439 = vpop.f32.mrb[0].mxu0
      %v2440 = vadd.f32 0.0, %v2439
      %v2441 = vpop.f32.mrb[0].mxu0
      %v2442 = vpop.f32.mrb[0].mxu0
      %v2443 = vadd.f32 0.0, %v2442
      %v2444 = vpop.f32.mrb[0].mxu0
      %2445 = vmatprep.mubr.bf16.mxu0 %v1663
      %2446 = vmatmul.mubr.bf16.gmra.mrb[0].mxu0 %v1660
      %v2447 = vpop.f32.mrb[0].mxu0
      %v2448 = vadd.f32 0.0, %v2447
      %v2449 = vpop.f32.mrb[0].mxu0
      %v2450 = vpop.f32.mrb[0].mxu0
      %v2451 = vadd.f32 0.0, %v2450
      %v2452 = vpop.f32.mrb[0].mxu0
      %2453 = vmatprep.mubr.bf16.mxu0 %v1669
      %2454 = vmatmul.mubr.bf16.gmra.mrb[0].mxu0 %v1666
      %v2455 = vpop.f32.mrb[0].mxu0
      %v2456 = vadd.f32 0.0, %v2455
      %v2457 = vpop.f32.mrb[0].mxu0
      %v2458 = vpop.f32.mrb[0].mxu0
      %v2459 = vadd.f32 0.0, %v2458
      %v2460 = vpop.f32.mrb[0].mxu0
      %2461 = vmatprep.mubr.bf16.mxu0 %v1675
      %2462 = vmatmul.mubr.bf16.gmra.mrb[0].mxu0 %v1672
      %v2463 = vpop.f32.mrb[0].mxu0
      %v2464 = vadd.f32 0.0, %v2463
      %v2465 = vpop.f32.mrb[0].mxu0
      %v2466 = vpop.f32.mrb[0].mxu0
      %v2467 = vadd.f32 0.0, %v2466
      %v2468 = vpop.f32.mrb[0].mxu0
      %2469 = vmatprep.mubr.bf16.mxu0 %v1681
      %2470 = vmatmul.mubr.bf16.gmra.mrb[0].mxu0 %v1678
      %v2471 = vpop.f32.mrb[0].mxu0
      %v2472 = vadd.f32 0.0, %v2471
      %v2473 = vpop.f32.mrb[0].mxu0
      %v2474 = vpop.f32.mrb[0].mxu0
      %v2475 = vadd.f32 0.0, %v2474
      %v2476 = vpop.f32.mrb[0].mxu0
      %2477 = vmatprep.mubr.bf16.mxu0 %v1687
      %2478 = vmatmul.mubr.bf16.gmra.mrb[0].mxu0 %v1684
      %v2479 = vpop.f32.mrb[0].mxu0
      %v2480 = vadd.f32 0.0, %v2479
      %v2481 = vpop.f32.mrb[0].mxu0
      %v2482 = vpop.f32.mrb[0].mxu0
      %v2483 = vadd.f32 0.0, %v2482
      %v2484 = vpop.f32.mrb[0].mxu0
      %2485 = vmatprep.mubr.bf16.mxu0 %v1693
      %2486 = vmatmul.mubr.bf16.gmra.mrb[0].mxu0 %v1690
      %v2487 = vpop.f32.mrb[0].mxu0
      %v2488 = vadd.f32 0.0, %v2487
      %v2489 = vpop.f32.mrb[0].mxu0
      %v2490 = vpop.f32.mrb[0].mxu0
      %v2491 = vadd.f32 0.0, %v2490
      %v2492 = vpop.f32.mrb[0].mxu0
      %2493 = vmatprep.mubr.bf16.mxu0 %v1699
      %2494 = vmatmul.mubr.bf16.gmra.mrb[0].mxu0 %v1696
      %v2495 = vpop.f32.mrb[0].mxu0
      %v2496 = vadd.f32 0.0, %v2495
      %v2497 = vpop.f32.mrb[0].mxu0
      %v2498 = vpop.f32.mrb[0].mxu0
      %v2499 = vadd.f32 0.0, %v2498
      %v2500 = vpop.f32.mrb[0].mxu0
      %2501 = vdwg.mxu0
      %v2502 = vadd.f32 %v2181, %v2376
      %v2503 = vadd.f32 %v2182, %v2379
      %v2504 = vadd.f32 %v2183, %v2384
      %v2505 = vadd.f32 %v2184, %v2387
      %v2506 = vadd.f32 %v2185, %v2392
      %v2507 = vadd.f32 %v2186, %v2395
      %v2508 = vadd.f32 %v2187, %v2400
      %v2509 = vadd.f32 %v2188, %v2403
      %v2510 = vadd.f32 %v2189, %v2408
      %v2511 = vadd.f32 %v2190, %v2411
      %v2512 = vadd.f32 %v2191, %v2416
      %v2513 = vadd.f32 %v2192, %v2419
      %v2514 = vadd.f32 %v2193, %v2424
      %v2515 = vadd.f32 %v2194, %v2427
      %v2516 = vadd.f32 %v2195, %v2432
      %v2517 = vadd.f32 %v2196, %v2435
      %v2518 = vadd.f32 %v2197, %v2440
      %v2519 = vadd.f32 %v2198, %v2443
      %v2520 = vadd.f32 %v2199, %v2448
      %v2521 = vadd.f32 %v2200, %v2451
      %v2522 = vadd.f32 %v2201, %v2456
      %v2523 = vadd.f32 %v2202, %v2459
      %v2524 = vadd.f32 %v2203, %v2464
      %v2525 = vadd.f32 %v2204, %v2467
      %v2526 = vadd.f32 %v2205, %v2472
      %v2527 = vadd.f32 %v2206, %v2475
      %v2528 = vadd.f32 %v2207, %v2480
      %v2529 = vadd.f32 %v2208, %v2483
      %v2530 = vadd.f32 %v2209, %v2488
      %v2531 = vadd.f32 %v2210, %v2491
      %v2532 = vadd.f32 %v2211, %v2496
      %v2533 = vadd.f32 %v2212, %v2499
      %2534 = vst [vmem:[#allocation4] sm:$0xff] %v2502
      %2535 = vst [vmem:[#allocation4 + $0x8] sm:$0xff] %v2503
      %2536 = vst [vmem:[#allocation4 + $0x10] sm:$0xff] %v2504
      %2537 = vst [vmem:[#allocation4 + $0x18] sm:$0xff] %v2505
      %2538 = vst [vmem:[#allocation4 + $0x20] sm:$0xff] %v2506
      %2539 = vst [vmem:[#allocation4 + $0x28] sm:$0xff] %v2507
      %2540 = vst [vmem:[#allocation4 + $0x30] sm:$0xff] %v2508
      %2541 = vst [vmem:[#allocation4 + $0x38] sm:$0xff] %v2509
      %2542 = vst [vmem:[#allocation4 + $0x40] sm:$0xff] %v2510
      %2543 = vst [vmem:[#allocation4 + $0x48] sm:$0xff] %v2511
      %2544 = vst [vmem:[#allocation4 + $0x50] sm:$0xff] %v2512
      %2545 = vst [vmem:[#allocation4 + $0x58] sm:$0xff] %v2513
      %2546 = vst [vmem:[#allocation4 + $0x60] sm:$0xff] %v2514
      %2547 = vst [vmem:[#allocation4 + $0x68] sm:$0xff] %v2515
      %2548 = vst [vmem:[#allocation4 + $0x70] sm:$0xff] %v2516
      %2549 = vst [vmem:[#allocation4 + $0x78] sm:$0xff] %v2517
      %2550 = vst [vmem:[#allocation4 + $0x80] sm:$0xff] %v2518
      %2551 = vst [vmem:[#allocation4 + $0x88] sm:$0xff] %v2519
      %2552 = vst [vmem:[#allocation4 + $0x90] sm:$0xff] %v2520
      %2553 = vst [vmem:[#allocation4 + $0x98] sm:$0xff] %v2521
      %2554 = vst [vmem:[#allocation4 + $0xa0] sm:$0xff] %v2522
      %2555 = vst [vmem:[#allocation4 + $0xa8] sm:$0xff] %v2523
      %2556 = vst [vmem:[#allocation4 + $0xb0] sm:$0xff] %v2524
      %2557 = vst [vmem:[#allocation4 + $0xb8] sm:$0xff] %v2525
      %2558 = vst [vmem:[#allocation4 + $0xc0] sm:$0xff] %v2526
      %2559 = vst [vmem:[#allocation4 + $0xc8] sm:$0xff] %v2527
      %2560 = vst [vmem:[#allocation4 + $0xd0] sm:$0xff] %v2528
      %2561 = vst [vmem:[#allocation4 + $0xd8] sm:$0xff] %v2529
      %2562 = vst [vmem:[#allocation4 + $0xe0] sm:$0xff] %v2530
      %2563 = vst [vmem:[#allocation4 + $0xe8] sm:$0xff] %v2531
      %2564 = vst [vmem:[#allocation4 + $0xf0] sm:$0xff] %v2532
      %2565 = vst [vmem:[#allocation4 + $0xf8] sm:$0xff] %v2533
      %2566 = vst.msk [vmem:[#allocation2] sm:$0xff] %vm1956, %v1220
      %2567 = vst.msk [vmem:[#allocation2 + $0x8] sm:$0xff] %vm1956, %v1221
      %2568 = vst.msk [vmem:[#allocation2 + $0x10] sm:$0xff] %vm1956, %v1222
      %2569 = vst.msk [vmem:[#allocation2 + $0x18] sm:$0xff] %vm1956, %v1223
      %2570 = vst.msk [vmem:[#allocation2 + $0x20] sm:$0xff] %vm1956, %v1224
      %2571 = vst.msk [vmem:[#allocation2 + $0x28] sm:$0xff] %vm1956, %v1225
      %2572 = vst.msk [vmem:[#allocation2 + $0x30] sm:$0xff] %vm1956, %v1226
      %2573 = vst.msk [vmem:[#allocation2 + $0x38] sm:$0xff] %vm1956, %v1227
      %2574 = vst.msk [vmem:[#allocation2 + $0x40] sm:$0xff] %vm1956, %v1228
      %2575 = vst.msk [vmem:[#allocation2 + $0x48] sm:$0xff] %vm1956, %v1229
      %2576 = vst.msk [vmem:[#allocation2 + $0x50] sm:$0xff] %vm1956, %v1230
      %2577 = vst.msk [vmem:[#allocation2 + $0x58] sm:$0xff] %vm1956, %v1231
      %2578 = vst.msk [vmem:[#allocation2 + $0x60] sm:$0xff] %vm1956, %v1232
      %2579 = vst.msk [vmem:[#allocation2 + $0x68] sm:$0xff] %vm1956, %v1233
      %2580 = vst.msk [vmem:[#allocation2 + $0x70] sm:$0xff] %vm1956, %v1234
      %2581 = vst.msk [vmem:[#allocation2 + $0x78] sm:$0xff] %vm1956, %v1235
      %2582 = vst.msk [vmem:[#allocation2 + $0x80] sm:$0xff] %vm1956, %v1236
      %2583 = vst.msk [vmem:[#allocation2 + $0x88] sm:$0xff] %vm1956, %v1237
      %2584 = vst.msk [vmem:[#allocation2 + $0x90] sm:$0xff] %vm1956, %v1238
      %2585 = vst.msk [vmem:[#allocation2 + $0x98] sm:$0xff] %vm1956, %v1239
      %2586 = vst.msk [vmem:[#allocation2 + $0xa0] sm:$0xff] %vm1956, %v1240
      %2587 = vst.msk [vmem:[#allocation2 + $0xa8] sm:$0xff] %vm1956, %v1241
      %2588 = vst.msk [vmem:[#allocation2 + $0xb0] sm:$0xff] %vm1956, %v1242
      %2589 = vst.msk [vmem:[#allocation2 + $0xb8] sm:$0xff] %vm1956, %v1243
      %2590 = vst.msk [vmem:[#allocation2 + $0xc0] sm:$0xff] %vm1956, %v1244
      %2591 = vst.msk [vmem:[#allocation2 + $0xc8] sm:$0xff] %vm1956, %v1245
      %2592 = vst.msk [vmem:[#allocation2 + $0xd0] sm:$0xff] %vm1956, %v1246
      %2593 = vst.msk [vmem:[#allocation2 + $0xd8] sm:$0xff] %vm1956, %v1247
      %2594 = vst.msk [vmem:[#allocation2 + $0xe0] sm:$0xff] %vm1956, %v1248
      %2595 = vst.msk [vmem:[#allocation2 + $0xe8] sm:$0xff] %vm1956, %v1249
      %2596 = vst.msk [vmem:[#allocation2 + $0xf0] sm:$0xff] %vm1956, %v1250
      %2597 = vst.msk [vmem:[#allocation2 + $0xf8] sm:$0xff] %vm1956, %v1251
    $region41: #{tpu_custom_call.1} parent=1 // pred_fallthru
      _
    // Predicated region
    $region42: #{tpu_custom_call.1} parent=1 // pred_check
      %p2598 = pneg %p104
    $region43: #{tpu_custom_call.1} parent=1 // pred_check_branch
      %2600 = sbr.rel (%p2598) target = $region45
    $region44: #{tpu_custom_call.1} parent=1 // pred_region
      %v2601 = vld [vmem:[#allocation3] sm:$0xff]
      %v2602 = vld [vmem:[#allocation3 + $0x8] sm:$0xff]
      %v2603 = vld [vmem:[#allocation3 + $0x10] sm:$0xff]
      %v2604 = vld [vmem:[#allocation3 + $0x18] sm:$0xff]
      %v2605 = vld [vmem:[#allocation3 + $0x20] sm:$0xff]
      %v2606 = vld [vmem:[#allocation3 + $0x28] sm:$0xff]
      %v2607 = vld [vmem:[#allocation3 + $0x30] sm:$0xff]
      %v2608 = vld [vmem:[#allocation3 + $0x38] sm:$0xff]
      %v2609 = vld [vmem:[#allocation3 + $0x40] sm:$0xff]
      %v2610 = vld [vmem:[#allocation3 + $0x48] sm:$0xff]
      %v2611 = vld [vmem:[#allocation3 + $0x50] sm:$0xff]
      %v2612 = vld [vmem:[#allocation3 + $0x58] sm:$0xff]
      %v2613 = vld [vmem:[#allocation3 + $0x60] sm:$0xff]
      %v2614 = vld [vmem:[#allocation3 + $0x68] sm:$0xff]
      %v2615 = vld [vmem:[#allocation3 + $0x70] sm:$0xff]
      %v2616 = vld [vmem:[#allocation3 + $0x78] sm:$0xff]
      %v2617 = vld [vmem:[#allocation3 + $0x80] sm:$0xff]
      %v2618 = vld [vmem:[#allocation3 + $0x88] sm:$0xff]
      %v2619 = vld [vmem:[#allocation3 + $0x90] sm:$0xff]
      %v2620 = vld [vmem:[#allocation3 + $0x98] sm:$0xff]
      %v2621 = vld [vmem:[#allocation3 + $0xa0] sm:$0xff]
      %v2622 = vld [vmem:[#allocation3 + $0xa8] sm:$0xff]
      %v2623 = vld [vmem:[#allocation3 + $0xb0] sm:$0xff]
      %v2624 = vld [vmem:[#allocation3 + $0xb8] sm:$0xff]
      %v2625 = vld [vmem:[#allocation3 + $0xc0] sm:$0xff]
      %v2626 = vld [vmem:[#allocation3 + $0xc8] sm:$0xff]
      %v2627 = vld [vmem:[#allocation3 + $0xd0] sm:$0xff]
      %v2628 = vld [vmem:[#allocation3 + $0xd8] sm:$0xff]
      %v2629 = vld [vmem:[#allocation3 + $0xe0] sm:$0xff]
      %v2630 = vld [vmem:[#allocation3 + $0xe8] sm:$0xff]
      %v2631 = vld [vmem:[#allocation3 + $0xf0] sm:$0xff]
      %v2632 = vld [vmem:[#allocation3 + $0xf8] sm:$0xff]
      %vm2633 = vcmp.gt.f32.partialorder %v2601, 0.0
      %vm2634 = vcmp.gt.f32.partialorder %v2602, 0.0
      %vm2635 = vcmp.gt.f32.partialorder %v2603, 0.0
      %vm2636 = vcmp.gt.f32.partialorder %v2604, 0.0
      %vm2637 = vcmp.gt.f32.partialorder %v2605, 0.0
      %vm2638 = vcmp.gt.f32.partialorder %v2606, 0.0
      %vm2639 = vcmp.gt.f32.partialorder %v2607, 0.0
      %vm2640 = vcmp.gt.f32.partialorder %v2608, 0.0
      %vm2641 = vcmp.gt.f32.partialorder %v2609, 0.0
      %vm2642 = vcmp.gt.f32.partialorder %v2610, 0.0
      %vm2643 = vcmp.gt.f32.partialorder %v2611, 0.0
      %vm2644 = vcmp.gt.f32.partialorder %v2612, 0.0
      %vm2645 = vcmp.gt.f32.partialorder %v2613, 0.0
      %vm2646 = vcmp.gt.f32.partialorder %v2614, 0.0
      %vm2647 = vcmp.gt.f32.partialorder %v2615, 0.0
      %vm2648 = vcmp.gt.f32.partialorder %v2616, 0.0
      %vm2649 = vcmp.gt.f32.partialorder %v2617, 0.0
      %vm2650 = vcmp.gt.f32.partialorder %v2618, 0.0
      %vm2651 = vcmp.gt.f32.partialorder %v2619, 0.0
      %vm2652 = vcmp.gt.f32.partialorder %v2620, 0.0
      %vm2653 = vcmp.gt.f32.partialorder %v2621, 0.0
      %vm2654 = vcmp.gt.f32.partialorder %v2622, 0.0
      %vm2655 = vcmp.gt.f32.partialorder %v2623, 0.0
      %vm2656 = vcmp.gt.f32.partialorder %v2624, 0.0
      %vm2657 = vcmp.gt.f32.partialorder %v2625, 0.0
      %vm2658 = vcmp.gt.f32.partialorder %v2626, 0.0
      %vm2659 = vcmp.gt.f32.partialorder %v2627, 0.0
      %vm2660 = vcmp.gt.f32.partialorder %v2628, 0.0
      %vm2661 = vcmp.gt.f32.partialorder %v2629, 0.0
      %vm2662 = vcmp.gt.f32.partialorder %v2630, 0.0
      %vm2663 = vcmp.gt.f32.partialorder %v2631, 0.0
      %vm2664 = vcmp.gt.f32.partialorder %v2632, 0.0
      %v2665 = vsel %vm2633, %v2601, 1.0
      %v2666 = vsel %vm2634, %v2602, 1.0
      %v2667 = vsel %vm2635, %v2603, 1.0
      %v2668 = vsel %vm2636, %v2604, 1.0
      %v2669 = vsel %vm2637, %v2605, 1.0
      %v2670 = vsel %vm2638, %v2606, 1.0
      %v2671 = vsel %vm2639, %v2607, 1.0
      %v2672 = vsel %vm2640, %v2608, 1.0
      %v2673 = vsel %vm2641, %v2609, 1.0
      %v2674 = vsel %vm2642, %v2610, 1.0
      %v2675 = vsel %vm2643, %v2611, 1.0
      %v2676 = vsel %vm2644, %v2612, 1.0
      %v2677 = vsel %vm2645, %v2613, 1.0
      %v2678 = vsel %vm2646, %v2614, 1.0
      %v2679 = vsel %vm2647, %v2615, 1.0
      %v2680 = vsel %vm2648, %v2616, 1.0
      %v2681 = vsel %vm2649, %v2617, 1.0
      %v2682 = vsel %vm2650, %v2618, 1.0
      %v2683 = vsel %vm2651, %v2619, 1.0
      %v2684 = vsel %vm2652, %v2620, 1.0
      %v2685 = vsel %vm2653, %v2621, 1.0
      %v2686 = vsel %vm2654, %v2622, 1.0
      %v2687 = vsel %vm2655, %v2623, 1.0
      %v2688 = vsel %vm2656, %v2624, 1.0
      %v2689 = vsel %vm2657, %v2625, 1.0
      %v2690 = vsel %vm2658, %v2626, 1.0
      %v2691 = vsel %vm2659, %v2627, 1.0
      %v2692 = vsel %vm2660, %v2628, 1.0
      %v2693 = vsel %vm2661, %v2629, 1.0
      %v2694 = vsel %vm2662, %v2630, 1.0
      %v2695 = vsel %vm2663, %v2631, 1.0
      %v2696 = vsel %vm2664, %v2632, 1.0
      %v2697 = vld [vmem:[#allocation4] sm:$0xff]
      %v2698 = vld [vmem:[#allocation4 + $0x8] sm:$0xff]
      %v2699 = vld [vmem:[#allocation4 + $0x10] sm:$0xff]
      %v2700 = vld [vmem:[#allocation4 + $0x18] sm:$0xff]
      %v2701 = vld [vmem:[#allocation4 + $0x20] sm:$0xff]
      %v2702 = vld [vmem:[#allocation4 + $0x28] sm:$0xff]
      %v2703 = vld [vmem:[#allocation4 + $0x30] sm:$0xff]
      %v2704 = vld [vmem:[#allocation4 + $0x38] sm:$0xff]
      %v2705 = vld [vmem:[#allocation4 + $0x40] sm:$0xff]
      %v2706 = vld [vmem:[#allocation4 + $0x48] sm:$0xff]
      %v2707 = vld [vmem:[#allocation4 + $0x50] sm:$0xff]
      %v2708 = vld [vmem:[#allocation4 + $0x58] sm:$0xff]
      %v2709 = vld [vmem:[#allocation4 + $0x60] sm:$0xff]
      %v2710 = vld [vmem:[#allocation4 + $0x68] sm:$0xff]
      %v2711 = vld [vmem:[#allocation4 + $0x70] sm:$0xff]
      %v2712 = vld [vmem:[#allocation4 + $0x78] sm:$0xff]
      %v2713 = vld [vmem:[#allocation4 + $0x80] sm:$0xff]
      %v2714 = vld [vmem:[#allocation4 + $0x88] sm:$0xff]
      %v2715 = vld [vmem:[#allocation4 + $0x90] sm:$0xff]
      %v2716 = vld [vmem:[#allocation4 + $0x98] sm:$0xff]
      %v2717 = vld [vmem:[#allocation4 + $0xa0] sm:$0xff]
      %v2718 = vld [vmem:[#allocation4 + $0xa8] sm:$0xff]
      %v2719 = vld [vmem:[#allocation4 + $0xb0] sm:$0xff]
      %v2720 = vld [vmem:[#allocation4 + $0xb8] sm:$0xff]
      %v2721 = vld [vmem:[#allocation4 + $0xc0] sm:$0xff]
      %v2722 = vld [vmem:[#allocation4 + $0xc8] sm:$0xff]
      %v2723 = vld [vmem:[#allocation4 + $0xd0] sm:$0xff]
      %v2724 = vld [vmem:[#allocation4 + $0xd8] sm:$0xff]
      %v2725 = vld [vmem:[#allocation4 + $0xe0] sm:$0xff]
      %v2726 = vld [vmem:[#allocation4 + $0xe8] sm:$0xff]
      %v2727 = vld [vmem:[#allocation4 + $0xf0] sm:$0xff]
      %v2728 = vld [vmem:[#allocation4 + $0xf8] sm:$0xff]
      %v2729 = vrcp.pop %v2665
      %v2730 = vrcp.pop %v2666
      %v2731 = vrcp.pop %v2667
      %v2732 = vrcp.pop %v2668
      %v2733 = vrcp.pop %v2669
      %v2734 = vrcp.pop %v2670
      %v2735 = vrcp.pop %v2671
      %v2736 = vrcp.pop %v2672
      %v2737 = vrcp.pop %v2673
      %v2738 = vrcp.pop %v2674
      %v2739 = vrcp.pop %v2675
      %v2740 = vrcp.pop %v2676
      %v2741 = vrcp.pop %v2677
      %v2742 = vrcp.pop %v2678
      %v2743 = vrcp.pop %v2679
      %v2744 = vrcp.pop %v2680
      %v2745 = vrcp.pop %v2681
      %v2746 = vrcp.pop %v2682
      %v2747 = vrcp.pop %v2683
      %v2748 = vrcp.pop %v2684
      %v2749 = vrcp.pop %v2685
      %v2750 = vrcp.pop %v2686
      %v2751 = vrcp.pop %v2687
      %v2752 = vrcp.pop %v2688
      %v2753 = vrcp.pop %v2689
      %v2754 = vrcp.pop %v2690
      %v2755 = vrcp.pop %v2691
      %v2756 = vrcp.pop %v2692
      %v2757 = vrcp.pop %v2693
      %v2758 = vrcp.pop %v2694
      %v2759 = vrcp.pop %v2695
      %v2760 = vrcp.pop %v2696
      %2762 = vset.pattern.permute.xlu0 0
      %2763 = vperm.xlu0 %2762, %v2729
      %v2764 = vpop.permute.xlu0 %2763
      %2767 = vset.pattern.permute.xlu0 0
      %2768 = vperm.xlu0 %2767, %v2730
      %v2769 = vpop.permute.xlu0 %2768
      %2772 = vset.pattern.permute.xlu0 0
      %2773 = vperm.xlu0 %2772, %v2731
      %v2774 = vpop.permute.xlu0 %2773
      %2777 = vset.pattern.permute.xlu0 0
      %2778 = vperm.xlu0 %2777, %v2732
      %v2779 = vpop.permute.xlu0 %2778
      %2782 = vset.pattern.permute.xlu0 0
      %2783 = vperm.xlu0 %2782, %v2733
      %v2784 = vpop.permute.xlu0 %2783
      %2787 = vset.pattern.permute.xlu0 0
      %2788 = vperm.xlu0 %2787, %v2734
      %v2789 = vpop.permute.xlu0 %2788
      %2792 = vset.pattern.permute.xlu0 0
      %2793 = vperm.xlu0 %2792, %v2735
      %v2794 = vpop.permute.xlu0 %2793
      %2797 = vset.pattern.permute.xlu0 0
      %2798 = vperm.xlu0 %2797, %v2736
      %v2799 = vpop.permute.xlu0 %2798
      %2802 = vset.pattern.permute.xlu0 0
      %2803 = vperm.xlu0 %2802, %v2737
      %v2804 = vpop.permute.xlu0 %2803
      %2807 = vset.pattern.permute.xlu0 0
      %2808 = vperm.xlu0 %2807, %v2738
      %v2809 = vpop.permute.xlu0 %2808
      %2812 = vset.pattern.permute.xlu0 0
      %2813 = vperm.xlu0 %2812, %v2739
      %v2814 = vpop.permute.xlu0 %2813
      %2817 = vset.pattern.permute.xlu0 0
      %2818 = vperm.xlu0 %2817, %v2740
      %v2819 = vpop.permute.xlu0 %2818
      %2822 = vset.pattern.permute.xlu0 0
      %2823 = vperm.xlu0 %2822, %v2741
      %v2824 = vpop.permute.xlu0 %2823
      %2827 = vset.pattern.permute.xlu0 0
      %2828 = vperm.xlu0 %2827, %v2742
      %v2829 = vpop.permute.xlu0 %2828
      %2832 = vset.pattern.permute.xlu0 0
      %2833 = vperm.xlu0 %2832, %v2743
      %v2834 = vpop.permute.xlu0 %2833
      %2837 = vset.pattern.permute.xlu0 0
      %2838 = vperm.xlu0 %2837, %v2744
      %v2839 = vpop.permute.xlu0 %2838
      %2842 = vset.pattern.permute.xlu0 0
      %2843 = vperm.xlu0 %2842, %v2745
      %v2844 = vpop.permute.xlu0 %2843
      %2847 = vset.pattern.permute.xlu0 0
      %2848 = vperm.xlu0 %2847, %v2746
      %v2849 = vpop.permute.xlu0 %2848
      %2852 = vset.pattern.permute.xlu0 0
      %2853 = vperm.xlu0 %2852, %v2747
      %v2854 = vpop.permute.xlu0 %2853
      %2857 = vset.pattern.permute.xlu0 0
      %2858 = vperm.xlu0 %2857, %v2748
      %v2859 = vpop.permute.xlu0 %2858
      %2862 = vset.pattern.permute.xlu0 0
      %2863 = vperm.xlu0 %2862, %v2749
      %v2864 = vpop.permute.xlu0 %2863
      %2867 = vset.pattern.permute.xlu0 0
      %2868 = vperm.xlu0 %2867, %v2750
      %v2869 = vpop.permute.xlu0 %2868
      %2872 = vset.pattern.permute.xlu0 0
      %2873 = vperm.xlu0 %2872, %v2751
      %v2874 = vpop.permute.xlu0 %2873
      %2877 = vset.pattern.permute.xlu0 0
      %2878 = vperm.xlu0 %2877, %v2752
      %v2879 = vpop.permute.xlu0 %2878
      %2882 = vset.pattern.permute.xlu0 0
      %2883 = vperm.xlu0 %2882, %v2753
      %v2884 = vpop.permute.xlu0 %2883
      %2887 = vset.pattern.permute.xlu0 0
      %2888 = vperm.xlu0 %2887, %v2754
      %v2889 = vpop.permute.xlu0 %2888
      %2892 = vset.pattern.permute.xlu0 0
      %2893 = vperm.xlu0 %2892, %v2755
      %v2894 = vpop.permute.xlu0 %2893
      %2897 = vset.pattern.permute.xlu0 0
      %2898 = vperm.xlu0 %2897, %v2756
      %v2899 = vpop.permute.xlu0 %2898
      %2902 = vset.pattern.permute.xlu0 0
      %2903 = vperm.xlu0 %2902, %v2757
      %v2904 = vpop.permute.xlu0 %2903
      %2907 = vset.pattern.permute.xlu0 0
      %2908 = vperm.xlu0 %2907, %v2758
      %v2909 = vpop.permute.xlu0 %2908
      %2912 = vset.pattern.permute.xlu0 0
      %2913 = vperm.xlu0 %2912, %v2759
      %v2914 = vpop.permute.xlu0 %2913
      %2917 = vset.pattern.permute.xlu0 0
      %2918 = vperm.xlu0 %2917, %v2760
      %v2919 = vpop.permute.xlu0 %2918
      %v2921 = vmul.f32 %v2697, %v2764
      %v2922 = vmul.f32 %v2698, %v2769
      %v2923 = vmul.f32 %v2699, %v2774
      %v2924 = vmul.f32 %v2700, %v2779
      %v2925 = vmul.f32 %v2701, %v2784
      %v2926 = vmul.f32 %v2702, %v2789
      %v2927 = vmul.f32 %v2703, %v2794
      %v2928 = vmul.f32 %v2704, %v2799
      %v2929 = vmul.f32 %v2705, %v2804
      %v2930 = vmul.f32 %v2706, %v2809
      %v2931 = vmul.f32 %v2707, %v2814
      %v2932 = vmul.f32 %v2708, %v2819
      %v2933 = vmul.f32 %v2709, %v2824
      %v2934 = vmul.f32 %v2710, %v2829
      %v2935 = vmul.f32 %v2711, %v2834
      %v2936 = vmul.f32 %v2712, %v2839
      %v2937 = vmul.f32 %v2713, %v2844
      %v2938 = vmul.f32 %v2714, %v2849
      %v2939 = vmul.f32 %v2715, %v2854
      %v2940 = vmul.f32 %v2716, %v2859
      %v2941 = vmul.f32 %v2717, %v2864
      %v2942 = vmul.f32 %v2718, %v2869
      %v2943 = vmul.f32 %v2719, %v2874
      %v2944 = vmul.f32 %v2720, %v2879
      %v2945 = vmul.f32 %v2721, %v2884
      %v2946 = vmul.f32 %v2722, %v2889
      %v2947 = vmul.f32 %v2723, %v2894
      %v2948 = vmul.f32 %v2724, %v2899
      %v2949 = vmul.f32 %v2725, %v2904
      %v2950 = vmul.f32 %v2726, %v2909
      %v2951 = vmul.f32 %v2727, %v2914
      %v2952 = vmul.f32 %v2728, %v2919
      %2953 = vst [vmem:[#allocation16] sm:$0xff] %v2921
      %2954 = vst [vmem:[#allocation16 + $0x8] sm:$0xff] %v2922
      %2955 = vst [vmem:[#allocation16 + $0x10] sm:$0xff] %v2923
      %2956 = vst [vmem:[#allocation16 + $0x18] sm:$0xff] %v2924
      %2957 = vst [vmem:[#allocation16 + $0x20] sm:$0xff] %v2925
      %2958 = vst [vmem:[#allocation16 + $0x28] sm:$0xff] %v2926
      %2959 = vst [vmem:[#allocation16 + $0x30] sm:$0xff] %v2927
      %2960 = vst [vmem:[#allocation16 + $0x38] sm:$0xff] %v2928
      %2961 = vst [vmem:[#allocation16 + $0x40] sm:$0xff] %v2929
      %2962 = vst [vmem:[#allocation16 + $0x48] sm:$0xff] %v2930
      %2963 = vst [vmem:[#allocation16 + $0x50] sm:$0xff] %v2931
      %2964 = vst [vmem:[#allocation16 + $0x58] sm:$0xff] %v2932
      %2965 = vst [vmem:[#allocation16 + $0x60] sm:$0xff] %v2933
      %2966 = vst [vmem:[#allocation16 + $0x68] sm:$0xff] %v2934
      %2967 = vst [vmem:[#allocation16 + $0x70] sm:$0xff] %v2935
      %2968 = vst [vmem:[#allocation16 + $0x78] sm:$0xff] %v2936
      %2969 = vst [vmem:[#allocation16 + $0x80] sm:$0xff] %v2937
      %2970 = vst [vmem:[#allocation16 + $0x88] sm:$0xff] %v2938
      %2971 = vst [vmem:[#allocation16 + $0x90] sm:$0xff] %v2939
      %2972 = vst [vmem:[#allocation16 + $0x98] sm:$0xff] %v2940
      %2973 = vst [vmem:[#allocation16 + $0xa0] sm:$0xff] %v2941
      %2974 = vst [vmem:[#allocation16 + $0xa8] sm:$0xff] %v2942
      %2975 = vst [vmem:[#allocation16 + $0xb0] sm:$0xff] %v2943
      %2976 = vst [vmem:[#allocation16 + $0xb8] sm:$0xff] %v2944
      %2977 = vst [vmem:[#allocation16 + $0xc0] sm:$0xff] %v2945
      %2978 = vst [vmem:[#allocation16 + $0xc8] sm:$0xff] %v2946
      %2979 = vst [vmem:[#allocation16 + $0xd0] sm:$0xff] %v2947
      %2980 = vst [vmem:[#allocation16 + $0xd8] sm:$0xff] %v2948
      %2981 = vst [vmem:[#allocation16 + $0xe0] sm:$0xff] %v2949
      %2982 = vst [vmem:[#allocation16 + $0xe8] sm:$0xff] %v2950
      %2983 = vst [vmem:[#allocation16 + $0xf0] sm:$0xff] %v2951
      %2984 = vst [vmem:[#allocation16 + $0xf8] sm:$0xff] %v2952
    $region45: #{tpu_custom_call.1} parent=1 // pred_fallthru
      _
    // Predicated region
    $region46: #{tpu_custom_call.1} parent=1 // pred_check
      _
    $region47: #{tpu_custom_call.1} parent=1 // pred_check_branch
      %2986 = sbr.rel (0) target = $region49
    $region48: #{tpu_custom_call.1} parent=1 // pred_region
      %s2988 = ssub.s32 4096, 4096
      %2989 = vsyncadd [#allocation10], %s2988
      %s2990 = sshll.u32 [#allocation16], 4
      %s2991 = int_to_ptr.vmem [resolvable:$true] %s2990
      %2996 = dma.vmem_to_hbm [thread:$0]  %s2991, 4096, %s6, [#allocation10], 128, 128, 8
    $region49: #{tpu_custom_call.1} parent=1 // pred_fallthru
      _
    // Predicated region
    $region50: #{tpu_custom_call.1} parent=1 // pred_check
      _
    $region51: #{tpu_custom_call.1} parent=1 // pred_check_branch
      %2998 = sbr.rel (0) target = $region53
    $region52: #{tpu_custom_call.1} parent=1 // pred_region
      %2999 = dma.done [#allocation10], 4096
    $region53: #{tpu_custom_call.1} parent=1 // pred_fallthru
      _
    %3000 = vsyncpa [#allocation9], 1
    %3001 = vsyncpa [#allocation12], 1
    %3002 = vsyncpa [#allocation15], 1
    %3003 = vsyncpa [#allocation10], 1

</llo_original>
